<compile_context>
chip_gen: v7x
topology: tpu7x:2x2x1
jax: 0.10.0
libtpu: 0.0.40
codegen_flags: <defaults>
</compile_context>

<pallas_src>
import functools

import jax
import jax.numpy as jnp
from jax.experimental import pallas as pl
from jax.experimental.pallas import tpu as pltpu


# --------------------------------------------------------------------------- kernel body

def dc_forward_kernel(x_ref, w_enc_ref, b_enc_ref, w_dec_ref, b_dec_ref,
                      o_ref, mu_ref, *, compute_dtype):
    """grid = (batch tile i [parallel], output-column tile j [arbitrary])."""

    # Normalize + encoder: once per batch tile, at the first output-column step.
    @pl.when(pl.program_id(1) == 0)
    def _():
        x = x_ref[...].astype(jnp.float32)
        # F.normalize(x, p=2, dim=1, eps=1e-12): x / max(||x||, 1e-12), done as a per-row
        # reciprocal (tb values) + one broadcast multiply so the wide op is not a divide.
        norm = jnp.sqrt(jnp.sum(x * x, axis=1, keepdims=True))          # (tb, 1) f32
        inv = pl.reciprocal(jnp.maximum(norm, 1e-12))                   # accurate recip
        xn = (x * inv).astype(compute_dtype)
        # Linear(num_item -> Hp): only the (zero-padded) mu half of the 2*hidden encoder.
        h = jnp.dot(xn, w_enc_ref[...], preferred_element_type=jnp.float32)
        mu_ref[...] = (h + b_enc_ref[...]).astype(mu_ref.dtype)

    # Decoder: Linear(Hp -> num_item), one lane-dense output-column tile per step; the mu
    # scratch is reused across all column tiles of the current batch tile.
    out = jnp.dot(mu_ref[...], w_dec_ref[...], preferred_element_type=jnp.float32)
    o_ref[...] = (out + b_dec_ref[...]).astype(o_ref.dtype)


# --------------------------------------------------------------------- capability probes

def _probe_copy_kernel(x_ref, o_ref):
    o_ref[...] = x_ref[...]


@functools.lru_cache(maxsize=None)
def _buffered_pipeline_supported():
    """Does this JAX build honor pipeline_mode=pl.Buffered(n) on a TPU pallas_call?"""
    try:
        spec = pl.BlockSpec((8, 128), lambda i: (0, 0), pipeline_mode=pl.Buffered(1))
        fn = pl.pallas_call(
            _probe_copy_kernel,
            out_shape=jax.ShapeDtypeStruct((8, 128), jnp.float32),
            grid=(2,),
            in_specs=[spec],
            out_specs=pl.BlockSpec((8, 128), lambda i: (0, 0)),
        )
        jax.jit(fn).lower(jax.ShapeDtypeStruct((8, 128), jnp.float32)).compile()
        return True
    except Exception:
        return False


@functools.lru_cache(maxsize=None)
def _vmem_capacity_bytes():
    """Physical VMEM per core (128 MiB on v5e/v6e, 64 MiB on v7x); conservative fallback."""
    try:
        return int(pltpu.get_tpu_info().vmem_capacity_bytes)
    except Exception:
        return 64 << 20   # assume v7x-sized VMEM if the query is unavailable


# ------------------------------------------------------------------ one-time weight prep

def prepare_dc_params(w_enc, b_enc, w_dec, b_dec, hidden, *, compute_dtype=jnp.bfloat16):
    """Model-load-time conversion: slice the mu half, pad hidden to 128 lanes, cast.

    w_enc: (num_item, 2*hidden), b_enc: (2*hidden,)   [nn.Linear(num_item, 2*hidden), pre-T]
    w_dec: (hidden, num_item),   b_dec: (num_item,)   [nn.Linear(hidden, num_item),   pre-T]
    """
    num_item = w_enc.shape[0]
    assert w_enc.shape == (num_item, 2 * hidden) and b_enc.shape == (2 * hidden,)
    assert w_dec.shape == (hidden, num_item) and b_dec.shape == (num_item,)

    cdt = jnp.dtype(compute_dtype)
    hp = ((hidden + 127) // 128) * 128            # pad mu lanes for MXU utilization

    w_enc_mu = w_enc[:, :hidden].astype(cdt)                          # (N, H)
    b_enc_mu = b_enc[:hidden].astype(jnp.float32)
    w_dec_c = w_dec.astype(cdt)                                       # (H, N)
    if hp != hidden:
        w_enc_mu = jnp.pad(w_enc_mu, ((0, 0), (0, hp - hidden)))      # zero cols -> mu pad = 0
        b_enc_mu = jnp.pad(b_enc_mu, (0, hp - hidden))
        w_dec_c = jnp.pad(w_dec_c, ((0, hp - hidden), (0, 0)))        # zero rows -> no effect

    return dict(
        w_enc_mu=w_enc_mu,                                            # (N, Hp)  compute dtype
        b_enc_mu=b_enc_mu.reshape(1, hp),                             # (1, Hp)  f32
        w_dec=w_dec_c,                                                # (Hp, N)  compute dtype
        b_dec=b_dec.astype(jnp.float32).reshape(1, num_item),         # (1, N)   f32
        num_item=num_item,
        hidden=hidden,
        hidden_padded=hp,
        compute_dtype=cdt,
    )


# --------------------------------------------------------------------------- forward call

def dc_forward(x, params, *, tb=None, tn=None, x_dma_dtype=jnp.bfloat16):
    """Eval-mode DC forward: (B, num_item) -> (B, num_item) float32 reconstruction scores.

    x_dma_dtype=bfloat16 halves the dominant per-batch-tile x DMA and is exact for binary
    (0/1) interaction rows; pass jnp.float32 for general-valued inputs.
    """
    B, N = x.shape
    assert N == params["num_item"], (N, params["num_item"])
    hp = params["hidden_padded"]
    cdt = params["compute_dtype"]
    x_dt = jnp.dtype(x_dma_dtype)

    use_buffered = _buffered_pipeline_supported()
    enc_bufs = 1 if use_buffered else 2

    def vmem_needed(tb_, tn_):
        return (2 * tb_ * N * x_dt.itemsize           # x batch tile (double-buffered)
                + enc_bufs * N * hp * cdt.itemsize    # encoder weight (grid-invariant)
                + enc_bufs * hp * 4                   # encoder bias
                + 2 * hp * tn_ * cdt.itemsize         # decoder weight column tile
                + 2 * tn_ * 4                         # decoder bias tile
                + 2 * tb_ * tn_ * 4                   # output tile
                + tb_ * hp * cdt.itemsize)            # mu scratch

    cap = _vmem_capacity_bytes()
    budget = int(cap * 0.8)        # ~51 MiB on v7x, ~102 MiB on v5e/v6e (scratch headroom)

    if tb is None:
        # Largest tb that keeps >= 2 batch tiles (so the "parallel" axis shards across
        # v7x's two TensorCores) and fits the per-core VMEM budget.
        tb_cap = max(B // 2, 8) if B >= 16 else B
        tb = B
        for t in (512, 256, 128, 64, 32, 16, 8):
            if t <= min(B, tb_cap) and B % t == 0:
                tb = t
                break
        while vmem_needed(tb, 128) > budget and tb % 16 == 0:
            tb //= 2
    if tn is None:
        # Large lane-dense output slabs amortize the ~0.35 us per-grid-step overhead.
        tn = N
        for t in (8192, 4096, 2048, 1024, 512, 256, 128):
            if t <= N and N % t == 0 and vmem_needed(tb, t) <= budget:
                tn = t
                break

    assert B % tb == 0 and N % tn == 0, (B, tb, N, tn)
    assert (tb % 8 == 0 or tb == B) and (tn % 128 == 0 or tn == N), (tb, tn)

    x = x.astype(x_dt)
    grid = (B // tb, N // tn)
    kernel = functools.partial(dc_forward_kernel, compute_dtype=cdt)

    if use_buffered:   # grid-invariant operands: single pipeline buffer (fetched once)
        enc_w_spec = pl.BlockSpec((N, hp), lambda i, j: (0, 0), pipeline_mode=pl.Buffered(1))
        enc_b_spec = pl.BlockSpec((1, hp), lambda i, j: (0, 0), pipeline_mode=pl.Buffered(1))
    else:
        enc_w_spec = pl.BlockSpec((N, hp), lambda i, j: (0, 0))
        enc_b_spec = pl.BlockSpec((1, hp), lambda i, j: (0, 0))

    # Advisory cost hint for XLA scheduling around the custom call.
    flops = 4 * B * N * hp + 3 * B * N
    bytes_accessed = (B * N * x_dt.itemsize                   # x (streamed once)
                      + N * hp * cdt.itemsize                 # encoder weight (once)
                      + (B // tb) * hp * N * cdt.itemsize     # decoder weight re-reads
                      + (hp + N) * 4                          # biases
                      + B * N * 4)                            # output
    vmem_limit = int(min(cap - (4 << 20), max(16 << 20, 2 * vmem_needed(tb, tn))))

    return pl.pallas_call(
        kernel,
        out_shape=jax.ShapeDtypeStruct((B, N), jnp.float32),
        grid_spec=pltpu.PrefetchScalarGridSpec(
            num_scalar_prefetch=0,
            grid=grid,
            in_specs=[
                pl.BlockSpec((tb, N), lambda i, j: (i, 0)),       # x: one batch tile
                enc_w_spec,                                       # encoder weight (mu half)
                enc_b_spec,                                       # encoder bias (mu half)
                pl.BlockSpec((hp, tn), lambda i, j: (0, j)),      # decoder weight col tile
                pl.BlockSpec((1, tn), lambda i, j: (0, j)),       # decoder bias tile
            ],
            out_specs=pl.BlockSpec((tb, tn), lambda i, j: (i, j)),
            scratch_shapes=[pltpu.VMEM((tb, hp), cdt)],           # mu, reused across j
        ),
        compiler_params=pltpu.CompilerParams(
            dimension_semantics=("parallel", "arbitrary"),
            vmem_limit_bytes=vmem_limit,
        ),
        cost_estimate=pl.CostEstimate(flops=flops, transcendentals=2 * B,
                                      bytes_accessed=bytes_accessed),
    )(x, params["w_enc_mu"], params["b_enc_mu"], params["w_dec"], params["b_dec"])


# ----------------------------------------------------------------------------- reference

def reference_forward(x, w_enc, b_enc, w_dec, b_dec, hidden):
    norm = jnp.sqrt(jnp.sum(x * x, axis=1, keepdims=True))
    xn = x / jnp.maximum(norm, 1e-12)
    h = xn @ w_enc + b_enc
    mu = h[:, :hidden]
    return mu @ w_dec + b_dec


if __name__ == "__main__":
    # Small synthetic config consistent with the module ("user x item" interaction rows):
    #   num_item = 1024, hidden = 64, batch = 256.
    B, NUM_ITEM, HIDDEN = 256, 1024, 64

    key = jax.random.PRNGKey(0)
    k_x, k_we, k_be, k_wd, k_bd = jax.random.split(key, 5)

    # Binary interaction matrix rows, like self.train_mat batches in the PyTorch code.
    x = (jax.random.uniform(k_x, (B, NUM_ITEM)) < 0.1).astype(jnp.float32)

    # Parameter init; shapes follow nn.Linear(num_item, 2*hidden) and nn.Linear(hidden,
    # num_item), stored pre-transposed for [M,K] @ [K,N].
    scale_e = 1.0 / (NUM_ITEM ** 0.5)
    scale_d = 1.0 / (HIDDEN ** 0.5)
    w_enc = jax.random.uniform(k_we, (NUM_ITEM, 2 * HIDDEN),
                               minval=-scale_e, maxval=scale_e).astype(jnp.float32)
    b_enc = jax.random.uniform(k_be, (2 * HIDDEN,),
                               minval=-scale_e, maxval=scale_e).astype(jnp.float32)
    w_dec = jax.random.uniform(k_wd, (HIDDEN, NUM_ITEM),
                               minval=-scale_d, maxval=scale_d).astype(jnp.float32)
    b_dec = jax.random.uniform(k_bd, (NUM_ITEM,),
                               minval=-scale_d, maxval=scale_d).astype(jnp.float32)

    ref = reference_forward(x, w_enc, b_enc, w_dec, b_dec, HIDDEN)

    # f32 compute path + f32 x DMA, explicit small tiles (exercises the multi-step
    # output-column axis and the pl.when(j == 0) encoder stage). Matches PyTorch eval math.
    params_f32 = prepare_dc_params(w_enc, b_enc, w_dec, b_dec, HIDDEN,
                                   compute_dtype=jnp.float32)
    out_f32 = jax.block_until_ready(
        dc_forward(x, params_f32, tb=64, tn=256, x_dma_dtype=jnp.float32))
    assert out_f32.shape == (B, NUM_ITEM)
    assert jnp.allclose(out_f32, ref, atol=1e-4, rtol=1e-4), "f32 mismatch vs reference"

    # bf16 compute path + bf16 x DMA (exact for 0/1 rows), auto tile / VMEM selection —
    # the recommended production config on v5e/v6e/v7x.
    params_bf16 = prepare_dc_params(w_enc, b_enc, w_dec, b_dec, HIDDEN,
                                    compute_dtype=jnp.bfloat16)
    out_bf16 = jax.block_until_ready(dc_forward(x, params_bf16))
    assert out_bf16.shape == (B, NUM_ITEM)
    assert jnp.allclose(out_bf16, ref, atol=2e-2, rtol=5e-2), "bf16 mismatch vs reference"

    print("KERNEL_OK")
</pallas_src>

<mosaic_0001>
module attributes {stable_mosaic.version = 11 : i64} {
  func.func @dc_forward_kernel(%arg0: i32, %arg1: i32, %arg2: memref<64x1024xf32, #tpu.memory_space<vmem>>, %arg3: memref<1024x128xf32, #tpu.memory_space<vmem>>, %arg4: memref<1x128xf32, #tpu.memory_space<vmem>>, %arg5: memref<128x256xf32, #tpu.memory_space<vmem>>, %arg6: memref<1x256xf32, #tpu.memory_space<vmem>>, %arg7: memref<64x256xf32, #tpu.memory_space<vmem>>, %arg8: memref<64x128xf32, #tpu.memory_space<vmem>>) attributes {dimension_semantics = [#tpu.dimension_semantics<parallel>, #tpu.dimension_semantics<arbitrary>], iteration_bounds = array<i64: 4, 4>, scalar_prefetch = 0 : i64, scratch_operands = 1 : i64, tpu.core_type = #tpu.core_type<tc>, window_params = [{transform_indices = @transform_0, window_bounds = array<i64: 64, 1024>}, {pipeline_mode = #tpu.pipeline_mode<synchronous>, transform_indices = @transform_1, window_bounds = array<i64: 1024, 128>}, {pipeline_mode = #tpu.pipeline_mode<synchronous>, transform_indices = @transform_2, window_bounds = array<i64: 1, 128>}, {transform_indices = @transform_3, window_bounds = array<i64: 128, 256>}, {transform_indices = @transform_4, window_bounds = array<i64: 1, 256>}, {transform_indices = @transform_5, window_bounds = array<i64: 64, 256>}]} {
    %c0_i32 = arith.constant 0 : i32
    %0 = arith.cmpi eq, %arg1, %c0_i32 : i32
    %1 = arith.extui %0 : i1 to i32
    %c0_i32_0 = arith.constant 0 : i32
    %2 = arith.cmpi ne, %1, %c0_i32_0 : i32
    scf.if %2 {
      %c0_8 = arith.constant 0 : index
      %c0_9 = arith.constant 0 : index
      %10 = vector.load %arg2[%c0_8, %c0_9] : memref<64x1024xf32, #tpu.memory_space<vmem>>, vector<64x1024xf32>
      %11 = arith.mulf %10, %10 : vector<64x1024xf32>
      %cst_10 = arith.constant dense<0.000000e+00> : vector<64xf32>
      %12 = vector.multi_reduction <add>, %11, %cst_10 [1] : vector<64x1024xf32> to vector<64xf32>
      %13 = vector.shape_cast %12 : vector<64xf32> to vector<64x1xf32>
      %14 = math.sqrt %13 : vector<64x1xf32>
      %cst_11 = arith.constant 9.99999996E-13 : f32
      %15 = vector.broadcast %cst_11 : f32 to vector<64x1xf32>
      %16 = arith.maximumf %14, %15 : vector<64x1xf32>
      %17 = tpu.reciprocal %16 : vector<64x1xf32> -> vector<64x1xf32>
      %18 = vector.broadcast %17 : vector<64x1xf32> to vector<64x1024xf32>
      %19 = arith.mulf %10, %18 : vector<64x1024xf32>
      %c0_12 = arith.constant 0 : index
      %c0_13 = arith.constant 0 : index
      %20 = vector.load %arg3[%c0_12, %c0_13] : memref<1024x128xf32, #tpu.memory_space<vmem>>, vector<1024x128xf32>
      %cst_14 = arith.constant dense<0.000000e+00> : vector<64x128xf32>
      %21 = tpu.matmul %19, %20, %cst_14 {dimension_numbers = #tpu.dot_dimension_numbers<[1], [0], [0], [1], [0, 0, 1, 1], [], []>} : vector<64x1024xf32>, vector<1024x128xf32>, vector<64x128xf32> -> vector<64x128xf32>
      %c0_15 = arith.constant 0 : index
      %c0_16 = arith.constant 0 : index
      %22 = vector.load %arg4[%c0_15, %c0_16] : memref<1x128xf32, #tpu.memory_space<vmem>>, vector<1x128xf32>
      %23 = vector.broadcast %22 : vector<1x128xf32> to vector<64x128xf32>
      %24 = arith.addf %21, %23 : vector<64x128xf32>
      %c0_17 = arith.constant 0 : index
      %c0_18 = arith.constant 0 : index
      %25 = vector.load %arg8[%c0_17, %c0_18] : memref<64x128xf32, #tpu.memory_space<vmem>>, vector<64x128xf32>
      tpu.vector_store %arg8[%c0_17, %c0_18], %24 {strides = array<i32>} : memref<64x128xf32, #tpu.memory_space<vmem>>, vector<64x128xf32>,
    } else {
    }
    %c0 = arith.constant 0 : index
    %c0_1 = arith.constant 0 : index
    %3 = vector.load %arg8[%c0, %c0_1] : memref<64x128xf32, #tpu.memory_space<vmem>>, vector<64x128xf32>
    %c0_2 = arith.constant 0 : index
    %c0_3 = arith.constant 0 : index
    %4 = vector.load %arg5[%c0_2, %c0_3] : memref<128x256xf32, #tpu.memory_space<vmem>>, vector<128x256xf32>
    %cst = arith.constant dense<0.000000e+00> : vector<64x256xf32>
    %5 = tpu.matmul %3, %4, %cst {dimension_numbers = #tpu.dot_dimension_numbers<[1], [0], [0], [1], [0, 0, 1, 1], [], []>} : vector<64x128xf32>, vector<128x256xf32>, vector<64x256xf32> -> vector<64x256xf32>
    %c0_4 = arith.constant 0 : index
    %c0_5 = arith.constant 0 : index
    %6 = vector.load %arg6[%c0_4, %c0_5] : memref<1x256xf32, #tpu.memory_space<vmem>>, vector<1x256xf32>
    %7 = vector.broadcast %6 : vector<1x256xf32> to vector<64x256xf32>
    %8 = arith.addf %5, %7 : vector<64x256xf32>
    %c0_6 = arith.constant 0 : index
    %c0_7 = arith.constant 0 : index
    %9 = vector.load %arg7[%c0_6, %c0_7] : memref<64x256xf32, #tpu.memory_space<vmem>>, vector<64x256xf32>
    tpu.vector_store %arg7[%c0_6, %c0_7], %8 {strides = array<i32>} : memref<64x256xf32, #tpu.memory_space<vmem>>, vector<64x256xf32>,
    return
  }
  func.func @transform_0(%arg0: i32, %arg1: i32) -> (i32, i32) {
    %c0_i32 = arith.constant 0 : i32
    %c0_i32_0 = arith.constant 0 : i32
    return %arg0, %c0_i32 : i32, i32
  }
  func.func @transform_1(%arg0: i32, %arg1: i32) -> (i32, i32) {
    %c0_i32 = arith.constant 0 : i32
    %c0_i32_0 = arith.constant 0 : i32
    %c0_i32_1 = arith.constant 0 : i32
    return %c0_i32, %c0_i32_0 : i32, i32
  }
  func.func @transform_2(%arg0: i32, %arg1: i32) -> (i32, i32) {
    %c0_i32 = arith.constant 0 : i32
    %c0_i32_0 = arith.constant 0 : i32
    %c0_i32_1 = arith.constant 0 : i32
    return %c0_i32, %c0_i32_0 : i32, i32
  }
  func.func @transform_3(%arg0: i32, %arg1: i32) -> (i32, i32) {
    %c0_i32 = arith.constant 0 : i32
    %c0_i32_0 = arith.constant 0 : i32
    return %c0_i32, %arg1 : i32, i32
  }
  func.func @transform_4(%arg0: i32, %arg1: i32) -> (i32, i32) {
    %c0_i32 = arith.constant 0 : i32
    %c0_i32_0 = arith.constant 0 : i32
    return %c0_i32, %arg1 : i32, i32
  }
  func.func @transform_5(%arg0: i32, %arg1: i32) -> (i32, i32) {
    %c0_i32 = arith.constant 0 : i32
    return %arg0, %arg1 : i32, i32
  }
}

</mosaic_0001>

<llo_original>
// kernel: tpu_custom_call.1
$region0: #{tpu_custom_call.1}
  #allocation0 [shape = 'u32[]', space=smem, size = 0x4, offset = 0x4, fixed_abs, tag = 'smem constant byte address 0x4 - core index']
  #allocation1 [shape = 'u32[144,128]{1,0:T(1,128)}', space=vmem, size = 0x12000, scoped, tag = 'internal scratch']
  #allocation2 [shape = 'f32[64,128]{1,0:T(8,128)}', space=vmem, size = 0x8000, scoped, tag = 'scratch operand']
  %s0 = inlined_call_operand.hbm [shape: f32[256,1024], index: 0, kind: input, shape index: {}]
  %s1 = inlined_call_operand.hbm [shape: f32[1024,128], index: 1, kind: input, shape index: {}]
  %s2 = inlined_call_operand.vmem [shape: f32[1,128], index: 2, kind: input, shape index: {}]
  %s3 = inlined_call_operand.hbm [shape: f32[128,1024], index: 3, kind: input, shape index: {}]
  %s4 = inlined_call_operand.vmem [shape: f32[1,1024], index: 4, kind: input, shape index: {}]
  %s5 = inlined_call_operand.hbm [shape: f32[256,1024], index: 5, kind: output, shape index: {}]
  %s6 = sld [smem:[#allocation0]]
  $region69: #{tpu_custom_call.1} parent=0
    _
  %s8 = ssub.s32 1, %s6
  %s9 = scalar_select 0, %s8, %s6
  $region1: #{tpu_custom_call.1} parent=0
    #allocation3 [shape = 'u8[524288]{0}', space=vmem, size = 0x80000, scoped, tag = 'input window, operand 0']
    #allocation4 [shape = 's32[2]{0}', space=sflag, size = 0x8, scoped, tag = 'scoped memory for tpu_custom_call.1']
    #allocation5 [shape = 's32[2]{0}', space=sflag, size = 0x8, scoped, tag = 'scoped memory for tpu_custom_call.1']
    #allocation6 [shape = 'u8[524288]{0}', space=vmem, size = 0x80000, scoped, tag = 'input window, operand 1, single buffered']
    #allocation7 [shape = 's32[1]{0}', space=sflag, size = 0x4, scoped, tag = 'scoped memory for tpu_custom_call.1']
    #allocation8 [shape = 'u8[262144]{0}', space=vmem, size = 0x40000, scoped, tag = 'input window, operand 3']
    #allocation9 [shape = 'u8[131072]{0}', space=vmem, size = 0x20000, scoped, tag = 'output window, operand 0']
    %10 = vsyncpa [#allocation4], 0
    %s11 = scalar_lea.sflag [#allocation4], 1
    %12 = vsyncpa %s11, 0
    %13 = vsyncpa [#allocation7], 0
    %14 = vsyncpa [#allocation5], 0
    %s15 = scalar_lea.sflag [#allocation5], 1
    %16 = vsyncpa %s15, 0
    loop: start=0, step=1, limit=18
    $region2: #{tpu_custom_call.1} parent=1 // loop_pre_header
      _
    $region3: #{tpu_custom_call.1} parent=1 // loop_header
      %s18 = sphi 0, %s22
      %p19 = scmp.ge.s32.totalorder %s18, 18
      %s25 = sphi 0, %s37
      %s26 = sphi 0, %s33
      %s27 = sphi 0, %s25
      %s28 = sphi 0, %s26
      %s29 = sphi 0, %s27
      %s30 = sphi 0, %s28
      %s40 = sphi 0, %s42
      %s43 = sphi 0, %s40
      %s44 = sphi 0, %s43
      %s60 = sphi 0, %s44
      %s64 = sphi 0, %s64
      %s66 = sphi 0, %s64
      %s67 = sphi 0, %s66
      %s81 = sphi 0, %s67
      %s85 = sphi 0, %s85
      %s87 = sphi 0, %s85
      %s88 = sphi 0, %s87
      %s102 = sphi 0, %s88
      %s108 = sphi 0, %s110
      %s111 = sphi 0, %s108
      %s112 = sphi 0, %s111
      %s128 = sphi 0, %s112
      %s134 = sphi 0, %s136
      %s137 = sphi 0, %s134
      %s138 = sphi 0, %s137
      %s154 = sphi 0, %s138
      %s162 = sphi 0, %s164
      %s165 = sphi 0, %s162
      %s166 = sphi 0, %s165
      %s182 = sphi 0, %s166
    $region4: #{tpu_custom_call.1} parent=1 // loop_header_branch
      %21 = sbr.rel (%p19) target = $region8
    $region5: #{tpu_custom_call.1} parent=1 // loop_body
      %s23 = ssub.s32 %s18, 1
      %s24 = ssub.s32 %s18, 2
      %s31 = sadd.s32 1, %s26
      %p32 = scmp.ge.s32.totalorder %s31, 4
      %s33 = scalar_select %p32, 0, %s31
      %s34 = sadd.s32 1, %s25
      %s35 = scalar_select %p32, %s34, %s25
      %p36 = scmp.ge.s32.totalorder %s35, 4
      %s37 = scalar_select %p36, 0, %s35
      %s38 = ssub.s32 %s25, %s37
      %p39 = scmp.eq.s32.totalorder %s38, 0
      %s41 = sadd.s32 %s40, 1
      %s42 = scalar_select %p39, %s40, %s41
      %p45 = pneg %p39
      %p46 = scmp.eq.s32.totalorder %s18, 15
      %p47 = por %p45, %p46
      %p48 = scmp.ne.s32.totalorder %s40, %s43
      %p49 = scmp.eq.s32.totalorder %s18, 0
      %p50 = por %p48, %p49
      %p51 = scmp.ne.s32.totalorder %s40, %s43
      %p52 = scmp.eq.s32.totalorder %s23, 15
      %p53 = por %p51, %p52
      %p54 = scmp.ne.s32.totalorder %s43, %s44
      %p55 = scmp.eq.s32.totalorder %s23, 0
      %p56 = por %p54, %p55
      %p57 = scmp.ne.s32.totalorder %s43, %s44
      %p58 = scmp.eq.s32.totalorder %s24, 15
      %p59 = por %p57, %p58
      %p61 = scmp.ne.s32.totalorder %s44, %s60
      %p62 = scmp.eq.s32.totalorder %s24, 0
      %p63 = por %p61, %p62
      %s65 = sadd.s32 %s64, 1
      %p68 = scmp.eq.s32.totalorder %s18, 15
      %p69 = scmp.ne.s32.totalorder %s64, %s66
      %p70 = scmp.eq.s32.totalorder %s18, 0
      %p71 = por %p69, %p70
      %p72 = scmp.ne.s32.totalorder %s64, %s66
      %p73 = scmp.eq.s32.totalorder %s23, 15
      %p74 = por %p72, %p73
      %p75 = scmp.ne.s32.totalorder %s66, %s67
      %p76 = scmp.eq.s32.totalorder %s23, 0
      %p77 = por %p75, %p76
      %p78 = scmp.ne.s32.totalorder %s66, %s67
      %p79 = scmp.eq.s32.totalorder %s24, 15
      %p80 = por %p78, %p79
      %p82 = scmp.ne.s32.totalorder %s67, %s81
      %p83 = scmp.eq.s32.totalorder %s24, 0
      %p84 = por %p82, %p83
      %s86 = sadd.s32 %s85, 1
      %p89 = scmp.eq.s32.totalorder %s18, 15
      %p90 = scmp.ne.s32.totalorder %s85, %s87
      %p91 = scmp.eq.s32.totalorder %s18, 0
      %p92 = por %p90, %p91
      %p93 = scmp.ne.s32.totalorder %s85, %s87
      %p94 = scmp.eq.s32.totalorder %s23, 15
      %p95 = por %p93, %p94
      %p96 = scmp.ne.s32.totalorder %s87, %s88
      %p97 = scmp.eq.s32.totalorder %s23, 0
      %p98 = por %p96, %p97
      %p99 = scmp.ne.s32.totalorder %s87, %s88
      %p100 = scmp.eq.s32.totalorder %s24, 15
      %p101 = por %p99, %p100
      %p103 = scmp.ne.s32.totalorder %s88, %s102
      %p104 = scmp.eq.s32.totalorder %s24, 0
      %p105 = por %p103, %p104
      %s106 = ssub.s32 %s26, %s33
      %p107 = scmp.eq.s32.totalorder %s106, 0
      %s109 = sadd.s32 %s108, 1
      %s110 = scalar_select %p107, %s108, %s109
      %p113 = pneg %p107
      %p114 = scmp.eq.s32.totalorder %s18, 15
      %p115 = por %p113, %p114
      %p116 = scmp.ne.s32.totalorder %s108, %s111
      %p117 = scmp.eq.s32.totalorder %s18, 0
      %p118 = por %p116, %p117
      %p119 = scmp.ne.s32.totalorder %s108, %s111
      %p120 = scmp.eq.s32.totalorder %s23, 15
      %p121 = por %p119, %p120
      %p122 = scmp.ne.s32.totalorder %s111, %s112
      %p123 = scmp.eq.s32.totalorder %s23, 0
      %p124 = por %p122, %p123
      %p125 = scmp.ne.s32.totalorder %s111, %s112
      %p126 = scmp.eq.s32.totalorder %s24, 15
      %p127 = por %p125, %p126
      %p129 = scmp.ne.s32.totalorder %s112, %s128
      %p130 = scmp.eq.s32.totalorder %s24, 0
      %p131 = por %p129, %p130
      %s132 = ssub.s32 %s26, %s33
      %p133 = scmp.eq.s32.totalorder %s132, 0
      %s135 = sadd.s32 %s134, 1
      %s136 = scalar_select %p133, %s134, %s135
      %p139 = pneg %p133
      %p140 = scmp.eq.s32.totalorder %s18, 15
      %p141 = por %p139, %p140
      %p142 = scmp.ne.s32.totalorder %s134, %s137
      %p143 = scmp.eq.s32.totalorder %s18, 0
      %p144 = por %p142, %p143
      %p145 = scmp.ne.s32.totalorder %s134, %s137
      %p146 = scmp.eq.s32.totalorder %s23, 15
      %p147 = por %p145, %p146
      %p148 = scmp.ne.s32.totalorder %s137, %s138
      %p149 = scmp.eq.s32.totalorder %s23, 0
      %p150 = por %p148, %p149
      %p151 = scmp.ne.s32.totalorder %s137, %s138
      %p152 = scmp.eq.s32.totalorder %s24, 15
      %p153 = por %p151, %p152
      %p155 = scmp.ne.s32.totalorder %s138, %s154
      %p156 = scmp.eq.s32.totalorder %s24, 0
      %p157 = por %p155, %p156
      %s158 = ssub.s32 %s25, %s37
      %s159 = ssub.s32 %s26, %s33
      %s160 = sor.u32 %s158, %s159
      %p161 = scmp.eq.s32.totalorder %s160, 0
      %s163 = sadd.s32 %s162, 1
      %s164 = scalar_select %p161, %s162, %s163
      %p167 = pneg %p161
      %p168 = scmp.eq.s32.totalorder %s18, 15
      %p169 = por %p167, %p168
      %p170 = scmp.ne.s32.totalorder %s162, %s165
      %p171 = scmp.eq.s32.totalorder %s18, 0
      %p172 = por %p170, %p171
      %p173 = scmp.ne.s32.totalorder %s162, %s165
      %p174 = scmp.eq.s32.totalorder %s23, 15
      %p175 = por %p173, %p174
      %p176 = scmp.ne.s32.totalorder %s165, %s166
      %p177 = scmp.eq.s32.totalorder %s23, 0
      %p178 = por %p176, %p177
      %p179 = scmp.ne.s32.totalorder %s165, %s166
      %p180 = scmp.eq.s32.totalorder %s24, 15
      %p181 = por %p179, %p180
      %p183 = scmp.ne.s32.totalorder %s166, %s182
      %p184 = scmp.eq.s32.totalorder %s24, 0
      %p185 = por %p183, %p184
      %p186 = scmp.le.s32.totalorder 1, %s18
      %p187 = scmp.lt.s32.totalorder %s18, 17
      %p188 = pnand %p186, %p187
      %p189 = pneg %p188
      // Predicated region
      $region9: #{tpu_custom_call.1} parent=5 // pred_check
        _
      $region10: #{tpu_custom_call.1} parent=5 // pred_check_branch
        %191 = sbr.rel (%p188) target = $region12
      $region11: #{tpu_custom_call.1} parent=5 // pred_region
        %s192 = ssub.s32 %s18, 1
        // Predicated region
        $region13: #{tpu_custom_call.1} parent=11 // pred_check
          %p193 = pneg %p77
        $region14: #{tpu_custom_call.1} parent=11 // pred_check_branch
          %195 = sbr.rel (%p193) target = $region16
        $region15: #{tpu_custom_call.1} parent=11 // pred_region
          %s197 = ssub.s32 16384, 16384
          %198 = vsyncadd [#allocation7], %s197
          %s199 = sshll.u32 [#allocation6], 4
          %s200 = int_to_ptr.vmem [resolvable:$true] %s199
          %205 = dma.hbm_to_vmem [thread:$0]  %s1, 16384, %s200, [#allocation7], 128, 128, 8
        $region16: #{tpu_custom_call.1} parent=11 // pred_fallthru
          _
        // Predicated region
        $region17: #{tpu_custom_call.1} parent=11 // pred_check
          %p206 = pneg %p98
        $region18: #{tpu_custom_call.1} parent=11 // pred_check_branch
          %208 = sbr.rel (%p206) target = $region20
        $region19: #{tpu_custom_call.1} parent=11 // pred_region
          _
        $region20: #{tpu_custom_call.1} parent=11 // pred_fallthru
          _
      $region12: #{tpu_custom_call.1} parent=5 // pred_fallthru
        _
      %p209 = scmp.lt.s32.totalorder %s18, 16
      // Predicated region
      $region21: #{tpu_custom_call.1} parent=5 // pred_check
        %p210 = pneg %p209
      $region22: #{tpu_custom_call.1} parent=5 // pred_check_branch
        %212 = sbr.rel (%p210) target = $region24
      $region23: #{tpu_custom_call.1} parent=5 // pred_region
        // Predicated region
        $region25: #{tpu_custom_call.1} parent=23 // pred_check
          %p213 = pneg %p50
        $region26: #{tpu_custom_call.1} parent=23 // pred_check_branch
          %215 = sbr.rel (%p213) target = $region28
        $region27: #{tpu_custom_call.1} parent=23 // pred_region
          %s216 = sand.u32 %s18, 1
          %s217 = scalar_lea.sflag [#allocation4], %s216
          %s218 = sand.u32 %s40, 1
          %s219 = smul.addr %s218, 512
          %s220 = scalar_lea.vmem [#allocation3], %s219
          %s221 = smul.u32 8, %s25
          %s223 = ssub.s32 8192, 8192
          %224 = vsyncadd %s217, %s223
          %s225 = smul.addr %s221, 8
          %s226 = smul.addr %s225, 128
          %s227 = scalar_lea.hbm %s0, %s226
          %s228 = sshll.u32 %s220, 4
          %s229 = int_to_ptr.vmem [resolvable:$true] %s228
          %234 = dma.hbm_to_vmem [thread:$0]  %s227, 8192, %s229, %s217, 1024, 1024, 64
        $region28: #{tpu_custom_call.1} parent=23 // pred_fallthru
          _
        // Predicated region
        $region29: #{tpu_custom_call.1} parent=23 // pred_check
          %p235 = pneg %p118
        $region30: #{tpu_custom_call.1} parent=23 // pred_check_branch
          %237 = sbr.rel (%p235) target = $region32
        $region31: #{tpu_custom_call.1} parent=23 // pred_region
          %s238 = sand.u32 %s18, 1
          %s239 = scalar_lea.sflag [#allocation4], %s238
          %s240 = sand.u32 %s108, 1
          %s241 = smul.addr %s240, 256
          %s242 = scalar_lea.vmem [#allocation8], %s241
          %s243 = smul.u32 2, %s26
          %s245 = ssub.s32 4096, 4096
          %246 = vsyncadd %s239, %s245
          %s247 = smul.addr %s243, 128
          %s248 = scalar_lea.hbm %s3, %s247
          %s249 = sshll.u32 %s242, 4
          %s250 = int_to_ptr.vmem [resolvable:$true] %s249
          %255 = dma.hbm_to_vmem [thread:$0]  %s248, 4096, %s250, %s239, 1024, 256, 16
        $region32: #{tpu_custom_call.1} parent=23 // pred_fallthru
          _
        // Predicated region
        $region33: #{tpu_custom_call.1} parent=23 // pred_check
          %p256 = pneg %p144
        $region34: #{tpu_custom_call.1} parent=23 // pred_check_branch
          %258 = sbr.rel (%p256) target = $region36
        $region35: #{tpu_custom_call.1} parent=23 // pred_region
          %s259 = smul.u32 2, %s26
          %p260 = scmp.lt.s32.totalorder %s259, 7
          %s261 = scalar_select %p260, %s259, 7
          %s262 = scalar_lea.vmem %s4, %s261
          %s263 = smul.u32 2, %s26
        $region36: #{tpu_custom_call.1} parent=23 // pred_fallthru
          _
      $region24: #{tpu_custom_call.1} parent=5 // pred_fallthru
        _
      %p264 = scmp.le.s32.totalorder 1, %s18
      %p265 = scmp.lt.s32.totalorder %s18, 17
      %p266 = pnand %p264, %p265
      %p267 = pneg %p266
      // Predicated region
      $region37: #{tpu_custom_call.1} parent=5 // pred_check
        _
      $region38: #{tpu_custom_call.1} parent=5 // pred_check_branch
        %269 = sbr.rel (%p266) target = $region40
      $region39: #{tpu_custom_call.1} parent=5 // pred_region
        %s270 = ssub.s32 %s18, 1
        %s271 = sand.u32 %s23, 1
        %s272 = scalar_lea.sflag [#allocation4], %s271
        %s273 = sand.u32 %s43, 1
        %s274 = smul.addr %s273, 512
        %s275 = scalar_lea.vmem [#allocation3], %s274
        // Predicated region
        $region41: #{tpu_custom_call.1} parent=39 // pred_check
          %p276 = pneg %p56
        $region42: #{tpu_custom_call.1} parent=39 // pred_check_branch
          %278 = sbr.rel (%p276) target = $region44
        $region43: #{tpu_custom_call.1} parent=39 // pred_region
          %279 = dma.done %s272, 8192
        $region44: #{tpu_custom_call.1} parent=39 // pred_fallthru
          _
        // Predicated region
        $region45: #{tpu_custom_call.1} parent=39 // pred_check
          %p280 = pneg %p77
        $region46: #{tpu_custom_call.1} parent=39 // pred_check_branch
          %282 = sbr.rel (%p280) target = $region48
        $region47: #{tpu_custom_call.1} parent=39 // pred_region
          %283 = dma.done [#allocation7], 16384
        $region48: #{tpu_custom_call.1} parent=39 // pred_fallthru
          _
        %s284 = sand.u32 %s23, 1
        %s285 = scalar_lea.sflag [#allocation4], %s284
        %s286 = sand.u32 %s111, 1
        %s287 = smul.addr %s286, 256
        %s288 = scalar_lea.vmem [#allocation8], %s287
        // Predicated region
        $region49: #{tpu_custom_call.1} parent=39 // pred_check
          %p289 = pneg %p124
        $region50: #{tpu_custom_call.1} parent=39 // pred_check_branch
          %291 = sbr.rel (%p289) target = $region52
        $region51: #{tpu_custom_call.1} parent=39 // pred_region
          %292 = dma.done %s285, 4096
        $region52: #{tpu_custom_call.1} parent=39 // pred_fallthru
          _
        %s293 = sand.u32 %s23, 1
        %s294 = scalar_lea.sflag [#allocation4], %s293
        %s295 = sand.u32 %s43, 1
        %s296 = smul.addr %s295, 512
        %s297 = scalar_lea.vmem [#allocation3], %s296
        %p298 = pneg %p56
        %p299 = pneg %p53
        %p300 = pneg %p77
        %p301 = pneg %p74
        %p302 = pneg %p98
        %p303 = pneg %p95
        %s304 = sand.u32 %s23, 1
        %s305 = scalar_lea.sflag [#allocation4], %s304
        %s306 = sand.u32 %s111, 1
        %s307 = smul.addr %s306, 256
        %s308 = scalar_lea.vmem [#allocation8], %s307
        %p309 = pneg %p124
        %p310 = pneg %p121
        %s311 = smul.u32 2, %s28
        %p312 = scmp.lt.s32.totalorder %s311, 7
        %s313 = scalar_select %p312, %s311, 7
        %s314 = scalar_lea.vmem %s4, %s313
        %p315 = pneg %p150
        %p316 = pneg %p147
        %p317 = pneg %p178
        %p318 = pneg %p175
        %s319 = sand.u32 %s165, 1
        %s320 = scalar_lea.sflag [#allocation5], %s319
        %s321 = sand.u32 %s165, 1
        %s322 = smul.addr %s321, 128
        %s323 = scalar_lea.vmem [#allocation9], %s322
        %s324 = smul.u32 8, %s27
        %s325 = smul.u32 2, %s28
        %s326 = smul.u32 2, %s28
        %p327 = scmp.lt.s32.totalorder %s326, 7
        %s328 = scalar_select %p327, %s326, 7
        %s329 = scalar_lea.vmem %s4, %s328
        %s330 = smul.u32 2, %s28
        %s331 = smul.u32 8, %s27
        %s332 = smul.u32 2, %s28
        %p333 = scmp.eq.s32.totalorder %s28, 0
        // Predicated region
        $region53: #{tpu_custom_call.1} parent=39 // pred_check
          %p334 = pneg %p333
        $region54: #{tpu_custom_call.1} parent=39 // pred_check_branch
          %336 = sbr.rel (%p334) target = $region56
        $region55: #{tpu_custom_call.1} parent=39 // pred_region
          %v337 = vld [vmem:[%s275] sm:$0xff]
          %v338 = vld [vmem:[%s275 + $0x8] sm:$0xff]
          %v339 = vld [vmem:[%s275 + $0x10] sm:$0xff]
          %v340 = vld [vmem:[%s275 + $0x18] sm:$0xff]
          %v341 = vld [vmem:[%s275 + $0x20] sm:$0xff]
          %v342 = vld [vmem:[%s275 + $0x28] sm:$0xff]
          %v343 = vld [vmem:[%s275 + $0x30] sm:$0xff]
          %v344 = vld [vmem:[%s275 + $0x38] sm:$0xff]
          %v345 = vld [vmem:[%s275 + $0x40] sm:$0xff]
          %v346 = vld [vmem:[%s275 + $0x48] sm:$0xff]
          %v347 = vld [vmem:[%s275 + $0x50] sm:$0xff]
          %v348 = vld [vmem:[%s275 + $0x58] sm:$0xff]
          %v349 = vld [vmem:[%s275 + $0x60] sm:$0xff]
          %v350 = vld [vmem:[%s275 + $0x68] sm:$0xff]
          %v351 = vld [vmem:[%s275 + $0x70] sm:$0xff]
          %v352 = vld [vmem:[%s275 + $0x78] sm:$0xff]
          %v353 = vld [vmem:[%s275 + $0x80] sm:$0xff]
          %v354 = vld [vmem:[%s275 + $0x88] sm:$0xff]
          %v355 = vld [vmem:[%s275 + $0x90] sm:$0xff]
          %v356 = vld [vmem:[%s275 + $0x98] sm:$0xff]
          %v357 = vld [vmem:[%s275 + $0xa0] sm:$0xff]
          %v358 = vld [vmem:[%s275 + $0xa8] sm:$0xff]
          %v359 = vld [vmem:[%s275 + $0xb0] sm:$0xff]
          %v360 = vld [vmem:[%s275 + $0xb8] sm:$0xff]
          %v361 = vld [vmem:[%s275 + $0xc0] sm:$0xff]
          %v362 = vld [vmem:[%s275 + $0xc8] sm:$0xff]
          %v363 = vld [vmem:[%s275 + $0xd0] sm:$0xff]
          %v364 = vld [vmem:[%s275 + $0xd8] sm:$0xff]
          %v365 = vld [vmem:[%s275 + $0xe0] sm:$0xff]
          %v366 = vld [vmem:[%s275 + $0xe8] sm:$0xff]
          %v367 = vld [vmem:[%s275 + $0xf0] sm:$0xff]
          %v368 = vld [vmem:[%s275 + $0xf8] sm:$0xff]
          %v369 = vld [vmem:[%s275 + $0x100] sm:$0xff]
          %v370 = vld [vmem:[%s275 + $0x108] sm:$0xff]
          %v371 = vld [vmem:[%s275 + $0x110] sm:$0xff]
          %v372 = vld [vmem:[%s275 + $0x118] sm:$0xff]
          %v373 = vld [vmem:[%s275 + $0x120] sm:$0xff]
          %v374 = vld [vmem:[%s275 + $0x128] sm:$0xff]
          %v375 = vld [vmem:[%s275 + $0x130] sm:$0xff]
          %v376 = vld [vmem:[%s275 + $0x138] sm:$0xff]
          %v377 = vld [vmem:[%s275 + $0x140] sm:$0xff]
          %v378 = vld [vmem:[%s275 + $0x148] sm:$0xff]
          %v379 = vld [vmem:[%s275 + $0x150] sm:$0xff]
          %v380 = vld [vmem:[%s275 + $0x158] sm:$0xff]
          %v381 = vld [vmem:[%s275 + $0x160] sm:$0xff]
          %v382 = vld [vmem:[%s275 + $0x168] sm:$0xff]
          %v383 = vld [vmem:[%s275 + $0x170] sm:$0xff]
          %v384 = vld [vmem:[%s275 + $0x178] sm:$0xff]
          %v385 = vld [vmem:[%s275 + $0x180] sm:$0xff]
          %v386 = vld [vmem:[%s275 + $0x188] sm:$0xff]
          %v387 = vld [vmem:[%s275 + $0x190] sm:$0xff]
          %v388 = vld [vmem:[%s275 + $0x198] sm:$0xff]
          %v389 = vld [vmem:[%s275 + $0x1a0] sm:$0xff]
          %v390 = vld [vmem:[%s275 + $0x1a8] sm:$0xff]
          %v391 = vld [vmem:[%s275 + $0x1b0] sm:$0xff]
          %v392 = vld [vmem:[%s275 + $0x1b8] sm:$0xff]
          %v393 = vld [vmem:[%s275 + $0x1c0] sm:$0xff]
          %v394 = vld [vmem:[%s275 + $0x1c8] sm:$0xff]
          %v395 = vld [vmem:[%s275 + $0x1d0] sm:$0xff]
          %v396 = vld [vmem:[%s275 + $0x1d8] sm:$0xff]
          %v397 = vld [vmem:[%s275 + $0x1e0] sm:$0xff]
          %v398 = vld [vmem:[%s275 + $0x1e8] sm:$0xff]
          %v399 = vld [vmem:[%s275 + $0x1f0] sm:$0xff]
          %v400 = vld [vmem:[%s275 + $0x1f8] sm:$0xff]
          %v401 = vmul.f32 %v337, %v337
          %v402 = vmul.f32 %v338, %v338
          %v403 = vmul.f32 %v339, %v339
          %v404 = vmul.f32 %v340, %v340
          %v405 = vmul.f32 %v341, %v341
          %v406 = vmul.f32 %v342, %v342
          %v407 = vmul.f32 %v343, %v343
          %v408 = vmul.f32 %v344, %v344
          %v409 = vmul.f32 %v345, %v345
          %v410 = vmul.f32 %v346, %v346
          %v411 = vmul.f32 %v347, %v347
          %v412 = vmul.f32 %v348, %v348
          %v413 = vmul.f32 %v349, %v349
          %v414 = vmul.f32 %v350, %v350
          %v415 = vmul.f32 %v351, %v351
          %v416 = vmul.f32 %v352, %v352
          %v417 = vmul.f32 %v353, %v353
          %v418 = vmul.f32 %v354, %v354
          %v419 = vmul.f32 %v355, %v355
          %v420 = vmul.f32 %v356, %v356
          %v421 = vmul.f32 %v357, %v357
          %v422 = vmul.f32 %v358, %v358
          %v423 = vmul.f32 %v359, %v359
          %v424 = vmul.f32 %v360, %v360
          %v425 = vmul.f32 %v361, %v361
          %v426 = vmul.f32 %v362, %v362
          %v427 = vmul.f32 %v363, %v363
          %v428 = vmul.f32 %v364, %v364
          %v429 = vmul.f32 %v365, %v365
          %v430 = vmul.f32 %v366, %v366
          %v431 = vmul.f32 %v367, %v367
          %v432 = vmul.f32 %v368, %v368
          %v433 = vmul.f32 %v369, %v369
          %v434 = vmul.f32 %v370, %v370
          %v435 = vmul.f32 %v371, %v371
          %v436 = vmul.f32 %v372, %v372
          %v437 = vmul.f32 %v373, %v373
          %v438 = vmul.f32 %v374, %v374
          %v439 = vmul.f32 %v375, %v375
          %v440 = vmul.f32 %v376, %v376
          %v441 = vmul.f32 %v377, %v377
          %v442 = vmul.f32 %v378, %v378
          %v443 = vmul.f32 %v379, %v379
          %v444 = vmul.f32 %v380, %v380
          %v445 = vmul.f32 %v381, %v381
          %v446 = vmul.f32 %v382, %v382
          %v447 = vmul.f32 %v383, %v383
          %v448 = vmul.f32 %v384, %v384
          %v449 = vmul.f32 %v385, %v385
          %v450 = vmul.f32 %v386, %v386
          %v451 = vmul.f32 %v387, %v387
          %v452 = vmul.f32 %v388, %v388
          %v453 = vmul.f32 %v389, %v389
          %v454 = vmul.f32 %v390, %v390
          %v455 = vmul.f32 %v391, %v391
          %v456 = vmul.f32 %v392, %v392
          %v457 = vmul.f32 %v393, %v393
          %v458 = vmul.f32 %v394, %v394
          %v459 = vmul.f32 %v395, %v395
          %v460 = vmul.f32 %v396, %v396
          %v461 = vmul.f32 %v397, %v397
          %v462 = vmul.f32 %v398, %v398
          %v463 = vmul.f32 %v399, %v399
          %v464 = vmul.f32 %v400, %v400
          %v465 = vadd.f32 %v401, %v402
          %v466 = vadd.f32 %v465, %v403
          %v467 = vadd.f32 %v466, %v404
          %v468 = vadd.f32 %v467, %v405
          %v469 = vadd.f32 %v468, %v406
          %v470 = vadd.f32 %v469, %v407
          %v471 = vadd.f32 %v470, %v408
          %472 = vadd.xlane.f32.xlu0 %v471
          %v473 = vpop.xlane.xlu0 %472
          %v474 = vadd.f32 %v409, %v410
          %v475 = vadd.f32 %v474, %v411
          %v476 = vadd.f32 %v475, %v412
          %v477 = vadd.f32 %v476, %v413
          %v478 = vadd.f32 %v477, %v414
          %v479 = vadd.f32 %v478, %v415
          %v480 = vadd.f32 %v479, %v416
          %481 = vadd.xlane.f32.xlu0 %v480
          %v482 = vpop.xlane.xlu0 %481
          %v483 = vadd.f32 %v417, %v418
          %v484 = vadd.f32 %v483, %v419
          %v485 = vadd.f32 %v484, %v420
          %v486 = vadd.f32 %v485, %v421
          %v487 = vadd.f32 %v486, %v422
          %v488 = vadd.f32 %v487, %v423
          %v489 = vadd.f32 %v488, %v424
          %490 = vadd.xlane.f32.xlu0 %v489
          %v491 = vpop.xlane.xlu0 %490
          %v492 = vadd.f32 %v425, %v426
          %v493 = vadd.f32 %v492, %v427
          %v494 = vadd.f32 %v493, %v428
          %v495 = vadd.f32 %v494, %v429
          %v496 = vadd.f32 %v495, %v430
          %v497 = vadd.f32 %v496, %v431
          %v498 = vadd.f32 %v497, %v432
          %499 = vadd.xlane.f32.xlu0 %v498
          %v500 = vpop.xlane.xlu0 %499
          %v501 = vadd.f32 %v433, %v434
          %v502 = vadd.f32 %v501, %v435
          %v503 = vadd.f32 %v502, %v436
          %v504 = vadd.f32 %v503, %v437
          %v505 = vadd.f32 %v504, %v438
          %v506 = vadd.f32 %v505, %v439
          %v507 = vadd.f32 %v506, %v440
          %508 = vadd.xlane.f32.xlu0 %v507
          %v509 = vpop.xlane.xlu0 %508
          %v510 = vadd.f32 %v441, %v442
          %v511 = vadd.f32 %v510, %v443
          %v512 = vadd.f32 %v511, %v444
          %v513 = vadd.f32 %v512, %v445
          %v514 = vadd.f32 %v513, %v446
          %v515 = vadd.f32 %v514, %v447
          %v516 = vadd.f32 %v515, %v448
          %517 = vadd.xlane.f32.xlu0 %v516
          %v518 = vpop.xlane.xlu0 %517
          %v519 = vadd.f32 %v449, %v450
          %v520 = vadd.f32 %v519, %v451
          %v521 = vadd.f32 %v520, %v452
          %v522 = vadd.f32 %v521, %v453
          %v523 = vadd.f32 %v522, %v454
          %v524 = vadd.f32 %v523, %v455
          %v525 = vadd.f32 %v524, %v456
          %526 = vadd.xlane.f32.xlu0 %v525
          %v527 = vpop.xlane.xlu0 %526
          %v528 = vadd.f32 %v457, %v458
          %v529 = vadd.f32 %v528, %v459
          %v530 = vadd.f32 %v529, %v460
          %v531 = vadd.f32 %v530, %v461
          %v532 = vadd.f32 %v531, %v462
          %v533 = vadd.f32 %v532, %v463
          %v534 = vadd.f32 %v533, %v464
          %535 = vadd.xlane.f32.xlu0 %v534
          %v536 = vpop.xlane.xlu0 %535
          %v537 = vrsqrt.pop %v473
          %v538 = vmul.f32 %v473, %v537
          %vm539 = vcmp.eq.f32.partialorder %v473, inf
          %v540 = vsel %vm539, %v473, %v538
          %vm541 = vcmp.eq.f32.partialorder %v473, 0.0
          %v542 = vand.u32 %v473, 2147483648
          %v543 = vsel %vm541, %v542, %v540
          %v544 = vrsqrt.pop %v482
          %v545 = vmul.f32 %v482, %v544
          %vm546 = vcmp.eq.f32.partialorder %v482, inf
          %v547 = vsel %vm546, %v482, %v545
          %vm548 = vcmp.eq.f32.partialorder %v482, 0.0
          %v549 = vand.u32 %v482, 2147483648
          %v550 = vsel %vm548, %v549, %v547
          %v551 = vrsqrt.pop %v491
          %v552 = vmul.f32 %v491, %v551
          %vm553 = vcmp.eq.f32.partialorder %v491, inf
          %v554 = vsel %vm553, %v491, %v552
          %vm555 = vcmp.eq.f32.partialorder %v491, 0.0
          %v556 = vand.u32 %v491, 2147483648
          %v557 = vsel %vm555, %v556, %v554
          %v558 = vrsqrt.pop %v500
          %v559 = vmul.f32 %v500, %v558
          %vm560 = vcmp.eq.f32.partialorder %v500, inf
          %v561 = vsel %vm560, %v500, %v559
          %vm562 = vcmp.eq.f32.partialorder %v500, 0.0
          %v563 = vand.u32 %v500, 2147483648
          %v564 = vsel %vm562, %v563, %v561
          %v565 = vrsqrt.pop %v509
          %v566 = vmul.f32 %v509, %v565
          %vm567 = vcmp.eq.f32.partialorder %v509, inf
          %v568 = vsel %vm567, %v509, %v566
          %vm569 = vcmp.eq.f32.partialorder %v509, 0.0
          %v570 = vand.u32 %v509, 2147483648
          %v571 = vsel %vm569, %v570, %v568
          %v572 = vrsqrt.pop %v518
          %v573 = vmul.f32 %v518, %v572
          %vm574 = vcmp.eq.f32.partialorder %v518, inf
          %v575 = vsel %vm574, %v518, %v573
          %vm576 = vcmp.eq.f32.partialorder %v518, 0.0
          %v577 = vand.u32 %v518, 2147483648
          %v578 = vsel %vm576, %v577, %v575
          %v579 = vrsqrt.pop %v527
          %v580 = vmul.f32 %v527, %v579
          %vm581 = vcmp.eq.f32.partialorder %v527, inf
          %v582 = vsel %vm581, %v527, %v580
          %vm583 = vcmp.eq.f32.partialorder %v527, 0.0
          %v584 = vand.u32 %v527, 2147483648
          %v585 = vsel %vm583, %v584, %v582
          %v586 = vrsqrt.pop %v536
          %v587 = vmul.f32 %v536, %v586
          %vm588 = vcmp.eq.f32.partialorder %v536, inf
          %v589 = vsel %vm588, %v536, %v587
          %vm590 = vcmp.eq.f32.partialorder %v536, 0.0
          %v591 = vand.u32 %v536, 2147483648
          %v592 = vsel %vm590, %v591, %v589
          %v593 = vmax.f32 %v543, 1e-12
          %v594 = vmax.f32 %v550, 1e-12
          %v595 = vmax.f32 %v557, 1e-12
          %v596 = vmax.f32 %v564, 1e-12
          %v597 = vmax.f32 %v571, 1e-12
          %v598 = vmax.f32 %v578, 1e-12
          %v599 = vmax.f32 %v585, 1e-12
          %v600 = vmax.f32 %v592, 1e-12
          %v601 = vrcp.pop %v593
          %v602 = vrcp.pop %v594
          %v603 = vrcp.pop %v595
          %v604 = vrcp.pop %v596
          %v605 = vrcp.pop %v597
          %v606 = vrcp.pop %v598
          %v607 = vrcp.pop %v599
          %v608 = vrcp.pop %v600
          %v609 = vmul.f32 %v337, %v601
          %v610 = vmul.f32 %v338, %v601
          %v611 = vmul.f32 %v339, %v601
          %v612 = vmul.f32 %v340, %v601
          %v613 = vmul.f32 %v341, %v601
          %v614 = vmul.f32 %v342, %v601
          %v615 = vmul.f32 %v343, %v601
          %v616 = vmul.f32 %v344, %v601
          %v617 = vmul.f32 %v345, %v602
          %v618 = vmul.f32 %v346, %v602
          %v619 = vmul.f32 %v347, %v602
          %v620 = vmul.f32 %v348, %v602
          %v621 = vmul.f32 %v349, %v602
          %v622 = vmul.f32 %v350, %v602
          %v623 = vmul.f32 %v351, %v602
          %v624 = vmul.f32 %v352, %v602
          %v625 = vmul.f32 %v353, %v603
          %v626 = vmul.f32 %v354, %v603
          %v627 = vmul.f32 %v355, %v603
          %v628 = vmul.f32 %v356, %v603
          %v629 = vmul.f32 %v357, %v603
          %v630 = vmul.f32 %v358, %v603
          %v631 = vmul.f32 %v359, %v603
          %v632 = vmul.f32 %v360, %v603
          %v633 = vmul.f32 %v361, %v604
          %v634 = vmul.f32 %v362, %v604
          %v635 = vmul.f32 %v363, %v604
          %v636 = vmul.f32 %v364, %v604
          %v637 = vmul.f32 %v365, %v604
          %v638 = vmul.f32 %v366, %v604
          %v639 = vmul.f32 %v367, %v604
          %v640 = vmul.f32 %v368, %v604
          %v641 = vmul.f32 %v369, %v605
          %v642 = vmul.f32 %v370, %v605
          %v643 = vmul.f32 %v371, %v605
          %v644 = vmul.f32 %v372, %v605
          %v645 = vmul.f32 %v373, %v605
          %v646 = vmul.f32 %v374, %v605
          %v647 = vmul.f32 %v375, %v605
          %v648 = vmul.f32 %v376, %v605
          %v649 = vmul.f32 %v377, %v606
          %v650 = vmul.f32 %v378, %v606
          %v651 = vmul.f32 %v379, %v606
          %v652 = vmul.f32 %v380, %v606
          %v653 = vmul.f32 %v381, %v606
          %v654 = vmul.f32 %v382, %v606
          %v655 = vmul.f32 %v383, %v606
          %v656 = vmul.f32 %v384, %v606
          %v657 = vmul.f32 %v385, %v607
          %v658 = vmul.f32 %v386, %v607
          %v659 = vmul.f32 %v387, %v607
          %v660 = vmul.f32 %v388, %v607
          %v661 = vmul.f32 %v389, %v607
          %v662 = vmul.f32 %v390, %v607
          %v663 = vmul.f32 %v391, %v607
          %v664 = vmul.f32 %v392, %v607
          %v665 = vmul.f32 %v393, %v608
          %v666 = vmul.f32 %v394, %v608
          %v667 = vmul.f32 %v395, %v608
          %v668 = vmul.f32 %v396, %v608
          %v669 = vmul.f32 %v397, %v608
          %v670 = vmul.f32 %v398, %v608
          %v671 = vmul.f32 %v399, %v608
          %v672 = vmul.f32 %v400, %v608
          %v673 = vld [vmem:[#allocation6] sm:$0xff]
          %v674 = vld [vmem:[#allocation6 + $0x8] sm:$0xff]
          %v675 = vld [vmem:[#allocation6 + $0x10] sm:$0xff]
          %v676 = vld [vmem:[#allocation6 + $0x18] sm:$0xff]
          %v677 = vld [vmem:[#allocation6 + $0x20] sm:$0xff]
          %v678 = vld [vmem:[#allocation6 + $0x28] sm:$0xff]
          %v679 = vld [vmem:[#allocation6 + $0x30] sm:$0xff]
          %v680 = vld [vmem:[#allocation6 + $0x38] sm:$0xff]
          %v681 = vld [vmem:[#allocation6 + $0x40] sm:$0xff]
          %v682 = vld [vmem:[#allocation6 + $0x48] sm:$0xff]
          %v683 = vld [vmem:[#allocation6 + $0x50] sm:$0xff]
          %v684 = vld [vmem:[#allocation6 + $0x58] sm:$0xff]
          %v685 = vld [vmem:[#allocation6 + $0x60] sm:$0xff]
          %v686 = vld [vmem:[#allocation6 + $0x68] sm:$0xff]
          %v687 = vld [vmem:[#allocation6 + $0x70] sm:$0xff]
          %v688 = vld [vmem:[#allocation6 + $0x78] sm:$0xff]
          %v689 = vld [vmem:[#allocation6 + $0x80] sm:$0xff]
          %v690 = vld [vmem:[#allocation6 + $0x88] sm:$0xff]
          %v691 = vld [vmem:[#allocation6 + $0x90] sm:$0xff]
          %v692 = vld [vmem:[#allocation6 + $0x98] sm:$0xff]
          %v693 = vld [vmem:[#allocation6 + $0xa0] sm:$0xff]
          %v694 = vld [vmem:[#allocation6 + $0xa8] sm:$0xff]
          %v695 = vld [vmem:[#allocation6 + $0xb0] sm:$0xff]
          %v696 = vld [vmem:[#allocation6 + $0xb8] sm:$0xff]
          %v697 = vld [vmem:[#allocation6 + $0xc0] sm:$0xff]
          %v698 = vld [vmem:[#allocation6 + $0xc8] sm:$0xff]
          %v699 = vld [vmem:[#allocation6 + $0xd0] sm:$0xff]
          %v700 = vld [vmem:[#allocation6 + $0xd8] sm:$0xff]
          %v701 = vld [vmem:[#allocation6 + $0xe0] sm:$0xff]
          %v702 = vld [vmem:[#allocation6 + $0xe8] sm:$0xff]
          %v703 = vld [vmem:[#allocation6 + $0xf0] sm:$0xff]
          %v704 = vld [vmem:[#allocation6 + $0xf8] sm:$0xff]
          %v705 = vld [vmem:[#allocation6 + $0x100] sm:$0xff]
          %v706 = vld [vmem:[#allocation6 + $0x108] sm:$0xff]
          %v707 = vld [vmem:[#allocation6 + $0x110] sm:$0xff]
          %v708 = vld [vmem:[#allocation6 + $0x118] sm:$0xff]
          %v709 = vld [vmem:[#allocation6 + $0x120] sm:$0xff]
          %v710 = vld [vmem:[#allocation6 + $0x128] sm:$0xff]
          %v711 = vld [vmem:[#allocation6 + $0x130] sm:$0xff]
          %v712 = vld [vmem:[#allocation6 + $0x138] sm:$0xff]
          %v713 = vld [vmem:[#allocation6 + $0x140] sm:$0xff]
          %v714 = vld [vmem:[#allocation6 + $0x148] sm:$0xff]
          %v715 = vld [vmem:[#allocation6 + $0x150] sm:$0xff]
          %v716 = vld [vmem:[#allocation6 + $0x158] sm:$0xff]
          %v717 = vld [vmem:[#allocation6 + $0x160] sm:$0xff]
          %v718 = vld [vmem:[#allocation6 + $0x168] sm:$0xff]
          %v719 = vld [vmem:[#allocation6 + $0x170] sm:$0xff]
          %v720 = vld [vmem:[#allocation6 + $0x178] sm:$0xff]
          %v721 = vld [vmem:[#allocation6 + $0x180] sm:$0xff]
          %v722 = vld [vmem:[#allocation6 + $0x188] sm:$0xff]
          %v723 = vld [vmem:[#allocation6 + $0x190] sm:$0xff]
          %v724 = vld [vmem:[#allocation6 + $0x198] sm:$0xff]
          %v725 = vld [vmem:[#allocation6 + $0x1a0] sm:$0xff]
          %v726 = vld [vmem:[#allocation6 + $0x1a8] sm:$0xff]
          %v727 = vld [vmem:[#allocation6 + $0x1b0] sm:$0xff]
          %v728 = vld [vmem:[#allocation6 + $0x1b8] sm:$0xff]
          %v729 = vld [vmem:[#allocation6 + $0x1c0] sm:$0xff]
          %v730 = vld [vmem:[#allocation6 + $0x1c8] sm:$0xff]
          %v731 = vld [vmem:[#allocation6 + $0x1d0] sm:$0xff]
          %v732 = vld [vmem:[#allocation6 + $0x1d8] sm:$0xff]
          %v733 = vld [vmem:[#allocation6 + $0x1e0] sm:$0xff]
          %v734 = vld [vmem:[#allocation6 + $0x1e8] sm:$0xff]
          %v735 = vld [vmem:[#allocation6 + $0x1f0] sm:$0xff]
          %v736 = vld [vmem:[#allocation6 + $0x1f8] sm:$0xff]
          %v737 = vld [vmem:[#allocation6 + $0x200] sm:$0xff]
          %v738 = vld [vmem:[#allocation6 + $0x208] sm:$0xff]
          %v739 = vld [vmem:[#allocation6 + $0x210] sm:$0xff]
          %v740 = vld [vmem:[#allocation6 + $0x218] sm:$0xff]
          %v741 = vld [vmem:[#allocation6 + $0x220] sm:$0xff]
          %v742 = vld [vmem:[#allocation6 + $0x228] sm:$0xff]
          %v743 = vld [vmem:[#allocation6 + $0x230] sm:$0xff]
          %v744 = vld [vmem:[#allocation6 + $0x238] sm:$0xff]
          %v745 = vld [vmem:[#allocation6 + $0x240] sm:$0xff]
          %v746 = vld [vmem:[#allocation6 + $0x248] sm:$0xff]
          %v747 = vld [vmem:[#allocation6 + $0x250] sm:$0xff]
          %v748 = vld [vmem:[#allocation6 + $0x258] sm:$0xff]
          %v749 = vld [vmem:[#allocation6 + $0x260] sm:$0xff]
          %v750 = vld [vmem:[#allocation6 + $0x268] sm:$0xff]
          %v751 = vld [vmem:[#allocation6 + $0x270] sm:$0xff]
          %v752 = vld [vmem:[#allocation6 + $0x278] sm:$0xff]
          %v753 = vld [vmem:[#allocation6 + $0x280] sm:$0xff]
          %v754 = vld [vmem:[#allocation6 + $0x288] sm:$0xff]
          %v755 = vld [vmem:[#allocation6 + $0x290] sm:$0xff]
          %v756 = vld [vmem:[#allocation6 + $0x298] sm:$0xff]
          %v757 = vld [vmem:[#allocation6 + $0x2a0] sm:$0xff]
          %v758 = vld [vmem:[#allocation6 + $0x2a8] sm:$0xff]
          %v759 = vld [vmem:[#allocation6 + $0x2b0] sm:$0xff]
          %v760 = vld [vmem:[#allocation6 + $0x2b8] sm:$0xff]
          %v761 = vld [vmem:[#allocation6 + $0x2c0] sm:$0xff]
          %v762 = vld [vmem:[#allocation6 + $0x2c8] sm:$0xff]
          %v763 = vld [vmem:[#allocation6 + $0x2d0] sm:$0xff]
          %v764 = vld [vmem:[#allocation6 + $0x2d8] sm:$0xff]
          %v765 = vld [vmem:[#allocation6 + $0x2e0] sm:$0xff]
          %v766 = vld [vmem:[#allocation6 + $0x2e8] sm:$0xff]
          %v767 = vld [vmem:[#allocation6 + $0x2f0] sm:$0xff]
          %v768 = vld [vmem:[#allocation6 + $0x2f8] sm:$0xff]
          %v769 = vld [vmem:[#allocation6 + $0x300] sm:$0xff]
          %v770 = vld [vmem:[#allocation6 + $0x308] sm:$0xff]
          %v771 = vld [vmem:[#allocation6 + $0x310] sm:$0xff]
          %v772 = vld [vmem:[#allocation6 + $0x318] sm:$0xff]
          %v773 = vld [vmem:[#allocation6 + $0x320] sm:$0xff]
          %v774 = vld [vmem:[#allocation6 + $0x328] sm:$0xff]
          %v775 = vld [vmem:[#allocation6 + $0x330] sm:$0xff]
          %v776 = vld [vmem:[#allocation6 + $0x338] sm:$0xff]
          %v777 = vld [vmem:[#allocation6 + $0x340] sm:$0xff]
          %v778 = vld [vmem:[#allocation6 + $0x348] sm:$0xff]
          %v779 = vld [vmem:[#allocation6 + $0x350] sm:$0xff]
          %v780 = vld [vmem:[#allocation6 + $0x358] sm:$0xff]
          %v781 = vld [vmem:[#allocation6 + $0x360] sm:$0xff]
          %v782 = vld [vmem:[#allocation6 + $0x368] sm:$0xff]
          %v783 = vld [vmem:[#allocation6 + $0x370] sm:$0xff]
          %v784 = vld [vmem:[#allocation6 + $0x378] sm:$0xff]
          %v785 = vld [vmem:[#allocation6 + $0x380] sm:$0xff]
          %v786 = vld [vmem:[#allocation6 + $0x388] sm:$0xff]
          %v787 = vld [vmem:[#allocation6 + $0x390] sm:$0xff]
          %v788 = vld [vmem:[#allocation6 + $0x398] sm:$0xff]
          %v789 = vld [vmem:[#allocation6 + $0x3a0] sm:$0xff]
          %v790 = vld [vmem:[#allocation6 + $0x3a8] sm:$0xff]
          %v791 = vld [vmem:[#allocation6 + $0x3b0] sm:$0xff]
          %v792 = vld [vmem:[#allocation6 + $0x3b8] sm:$0xff]
          %v793 = vld [vmem:[#allocation6 + $0x3c0] sm:$0xff]
          %v794 = vld [vmem:[#allocation6 + $0x3c8] sm:$0xff]
          %v795 = vld [vmem:[#allocation6 + $0x3d0] sm:$0xff]
          %v796 = vld [vmem:[#allocation6 + $0x3d8] sm:$0xff]
          %v797 = vld [vmem:[#allocation6 + $0x3e0] sm:$0xff]
          %v798 = vld [vmem:[#allocation6 + $0x3e8] sm:$0xff]
          %v799 = vld [vmem:[#allocation6 + $0x3f0] sm:$0xff]
          %v800 = vld [vmem:[#allocation6 + $0x3f8] sm:$0xff]
          %v801 = vld [vmem:[%s2] sm:$0x1]
          %v803 = vlaneseq
          %v804 = vshrl.u32 %v803, 7
          %v805 = vsub.s32 0, %v804
          %v806 = vrot.slane %v801, %v805
          %808 = vmatprep.subr.mxu0 0.0
          %809 = vmatpush1.msra.mxu0 %v673
          %810 = vmatprep.subr.mxu0 0.0
          %811 = vmatpush1.msra.mxu0 %v674
          %812 = vmatprep.subr.mxu0 0.0
          %813 = vmatpush1.msra.mxu0 %v675
          %814 = vmatprep.subr.mxu0 0.0
          %815 = vmatpush1.msra.mxu0 %v676
          %816 = vmatprep.subr.mxu0 0.0
          %817 = vmatpush1.msra.mxu0 %v677
          %818 = vmatprep.subr.mxu0 0.0
          %819 = vmatpush1.msra.mxu0 %v678
          %820 = vmatprep.subr.mxu0 0.0
          %821 = vmatpush1.msra.mxu0 %v679
          %822 = vmatprep.subr.mxu0 0.0
          %823 = vmatpush1.msra.mxu0 %v680
          %824 = vmatprep.subr.mxu0 0.0
          %825 = vmatpush1.msra.mxu0 %v681
          %826 = vmatprep.subr.mxu0 0.0
          %827 = vmatpush1.msra.mxu0 %v682
          %828 = vmatprep.subr.mxu0 0.0
          %829 = vmatpush1.msra.mxu0 %v683
          %830 = vmatprep.subr.mxu0 0.0
          %831 = vmatpush1.msra.mxu0 %v684
          %832 = vmatprep.subr.mxu0 0.0
          %833 = vmatpush1.msra.mxu0 %v685
          %834 = vmatprep.subr.mxu0 0.0
          %835 = vmatpush1.msra.mxu0 %v686
          %836 = vmatprep.subr.mxu0 0.0
          %837 = vmatpush1.msra.mxu0 %v687
          %838 = vmatprep.subr.mxu0 0.0
          %839 = vmatpush1.msra.mxu0 %v688
          %840 = vmatprep.subr.mxu0 0.0
          %841 = vmatpush1.msra.mxu0 %v689
          %842 = vmatprep.subr.mxu0 0.0
          %843 = vmatpush1.msra.mxu0 %v690
          %844 = vmatprep.subr.mxu0 0.0
          %845 = vmatpush1.msra.mxu0 %v691
          %846 = vmatprep.subr.mxu0 0.0
          %847 = vmatpush1.msra.mxu0 %v692
          %848 = vmatprep.subr.mxu0 0.0
          %849 = vmatpush1.msra.mxu0 %v693
          %850 = vmatprep.subr.mxu0 0.0
          %851 = vmatpush1.msra.mxu0 %v694
          %852 = vmatprep.subr.mxu0 0.0
          %853 = vmatpush1.msra.mxu0 %v695
          %854 = vmatprep.subr.mxu0 0.0
          %855 = vmatpush1.msra.mxu0 %v696
          %856 = vmatprep.subr.mxu0 0.0
          %857 = vmatpush1.msra.mxu0 %v697
          %858 = vmatprep.subr.mxu0 0.0
          %859 = vmatpush1.msra.mxu0 %v698
          %860 = vmatprep.subr.mxu0 0.0
          %861 = vmatpush1.msra.mxu0 %v699
          %862 = vmatprep.subr.mxu0 0.0
          %863 = vmatpush1.msra.mxu0 %v700
          %864 = vmatprep.subr.mxu0 0.0
          %865 = vmatpush1.msra.mxu0 %v701
          %866 = vmatprep.subr.mxu0 0.0
          %867 = vmatpush1.msra.mxu0 %v702
          %868 = vmatprep.subr.mxu0 0.0
          %869 = vmatpush1.msra.mxu0 %v703
          %870 = vmatprep.subr.mxu0 0.0
          %871 = vmatpush1.msra.mxu0 %v704
          %872 = vmatprep.mubr.f32.mxu0 %v610
          %873 = vmatmul.mubr.f32.gmra.mrb[0].mxu0 %v609
          %v874 = vpop.f32.mrb[0].mxu0
          %v875 = vadd.f32 %v806, %v874
          %v876 = vpop.f32.mrb[0].mxu0
          %877 = vmatprep.mubr.f32.mxu0 %v618
          %878 = vmatmul.mubr.f32.gmra.mrb[0].mxu0 %v617
          %v879 = vpop.f32.mrb[0].mxu0
          %v880 = vadd.f32 %v806, %v879
          %v881 = vpop.f32.mrb[0].mxu0
          %882 = vmatprep.mubr.f32.mxu0 %v626
          %883 = vmatmul.mubr.f32.gmra.mrb[0].mxu0 %v625
          %v884 = vpop.f32.mrb[0].mxu0
          %v885 = vadd.f32 %v806, %v884
          %v886 = vpop.f32.mrb[0].mxu0
          %887 = vmatprep.mubr.f32.mxu0 %v634
          %888 = vmatmul.mubr.f32.gmra.mrb[0].mxu0 %v633
          %v889 = vpop.f32.mrb[0].mxu0
          %v890 = vadd.f32 %v806, %v889
          %v891 = vpop.f32.mrb[0].mxu0
          %892 = vmatprep.mubr.f32.mxu0 %v642
          %893 = vmatmul.mubr.f32.gmra.mrb[0].mxu0 %v641
          %v894 = vpop.f32.mrb[0].mxu0
          %v895 = vadd.f32 %v806, %v894
          %v896 = vpop.f32.mrb[0].mxu0
          %897 = vmatprep.mubr.f32.mxu0 %v650
          %898 = vmatmul.mubr.f32.gmra.mrb[0].mxu0 %v649
          %v899 = vpop.f32.mrb[0].mxu0
          %v900 = vadd.f32 %v806, %v899
          %v901 = vpop.f32.mrb[0].mxu0
          %902 = vmatprep.mubr.f32.mxu0 %v658
          %903 = vmatmul.mubr.f32.gmra.mrb[0].mxu0 %v657
          %v904 = vpop.f32.mrb[0].mxu0
          %v905 = vadd.f32 %v806, %v904
          %v906 = vpop.f32.mrb[0].mxu0
          %907 = vmatprep.mubr.f32.mxu0 %v666
          %908 = vmatmul.mubr.f32.gmra.mrb[0].mxu0 %v665
          %v909 = vpop.f32.mrb[0].mxu0
          %v910 = vadd.f32 %v806, %v909
          %v911 = vpop.f32.mrb[0].mxu0
          %912 = vdwg.mxu0
          %913 = vmatprep.subr.mxu0 0.0
          %914 = vmatpush1.msra.mxu0 %v705
          %915 = vmatprep.subr.mxu0 0.0
          %916 = vmatpush1.msra.mxu0 %v706
          %917 = vmatprep.subr.mxu0 0.0
          %918 = vmatpush1.msra.mxu0 %v707
          %919 = vmatprep.subr.mxu0 0.0
          %920 = vmatpush1.msra.mxu0 %v708
          %921 = vmatprep.subr.mxu0 0.0
          %922 = vmatpush1.msra.mxu0 %v709
          %923 = vmatprep.subr.mxu0 0.0
          %924 = vmatpush1.msra.mxu0 %v710
          %925 = vmatprep.subr.mxu0 0.0
          %926 = vmatpush1.msra.mxu0 %v711
          %927 = vmatprep.subr.mxu0 0.0
          %928 = vmatpush1.msra.mxu0 %v712
          %929 = vmatprep.subr.mxu0 0.0
          %930 = vmatpush1.msra.mxu0 %v713
          %931 = vmatprep.subr.mxu0 0.0
          %932 = vmatpush1.msra.mxu0 %v714
          %933 = vmatprep.subr.mxu0 0.0
          %934 = vmatpush1.msra.mxu0 %v715
          %935 = vmatprep.subr.mxu0 0.0
          %936 = vmatpush1.msra.mxu0 %v716
          %937 = vmatprep.subr.mxu0 0.0
          %938 = vmatpush1.msra.mxu0 %v717
          %939 = vmatprep.subr.mxu0 0.0
          %940 = vmatpush1.msra.mxu0 %v718
          %941 = vmatprep.subr.mxu0 0.0
          %942 = vmatpush1.msra.mxu0 %v719
          %943 = vmatprep.subr.mxu0 0.0
          %944 = vmatpush1.msra.mxu0 %v720
          %945 = vmatprep.subr.mxu0 0.0
          %946 = vmatpush1.msra.mxu0 %v721
          %947 = vmatprep.subr.mxu0 0.0
          %948 = vmatpush1.msra.mxu0 %v722
          %949 = vmatprep.subr.mxu0 0.0
          %950 = vmatpush1.msra.mxu0 %v723
          %951 = vmatprep.subr.mxu0 0.0
          %952 = vmatpush1.msra.mxu0 %v724
          %953 = vmatprep.subr.mxu0 0.0
          %954 = vmatpush1.msra.mxu0 %v725
          %955 = vmatprep.subr.mxu0 0.0
          %956 = vmatpush1.msra.mxu0 %v726
          %957 = vmatprep.subr.mxu0 0.0
          %958 = vmatpush1.msra.mxu0 %v727
          %959 = vmatprep.subr.mxu0 0.0
          %960 = vmatpush1.msra.mxu0 %v728
          %961 = vmatprep.subr.mxu0 0.0
          %962 = vmatpush1.msra.mxu0 %v729
          %963 = vmatprep.subr.mxu0 0.0
          %964 = vmatpush1.msra.mxu0 %v730
          %965 = vmatprep.subr.mxu0 0.0
          %966 = vmatpush1.msra.mxu0 %v731
          %967 = vmatprep.subr.mxu0 0.0
          %968 = vmatpush1.msra.mxu0 %v732
          %969 = vmatprep.subr.mxu0 0.0
          %970 = vmatpush1.msra.mxu0 %v733
          %971 = vmatprep.subr.mxu0 0.0
          %972 = vmatpush1.msra.mxu0 %v734
          %973 = vmatprep.subr.mxu0 0.0
          %974 = vmatpush1.msra.mxu0 %v735
          %975 = vmatprep.subr.mxu0 0.0
          %976 = vmatpush1.msra.mxu0 %v736
          %977 = vmatprep.mubr.f32.mxu0 %v612
          %978 = vmatmul.mubr.f32.gmra.mrb[0].mxu0 %v611
          %v979 = vpop.f32.mrb[0].mxu0
          %v980 = vadd.f32 %v875, %v979
          %v981 = vpop.f32.mrb[0].mxu0
          %982 = vmatprep.mubr.f32.mxu0 %v620
          %983 = vmatmul.mubr.f32.gmra.mrb[0].mxu0 %v619
          %v984 = vpop.f32.mrb[0].mxu0
          %v985 = vadd.f32 %v880, %v984
          %v986 = vpop.f32.mrb[0].mxu0
          %987 = vmatprep.mubr.f32.mxu0 %v628
          %988 = vmatmul.mubr.f32.gmra.mrb[0].mxu0 %v627
          %v989 = vpop.f32.mrb[0].mxu0
          %v990 = vadd.f32 %v885, %v989
          %v991 = vpop.f32.mrb[0].mxu0
          %992 = vmatprep.mubr.f32.mxu0 %v636
          %993 = vmatmul.mubr.f32.gmra.mrb[0].mxu0 %v635
          %v994 = vpop.f32.mrb[0].mxu0
          %v995 = vadd.f32 %v890, %v994
          %v996 = vpop.f32.mrb[0].mxu0
          %997 = vmatprep.mubr.f32.mxu0 %v644
          %998 = vmatmul.mubr.f32.gmra.mrb[0].mxu0 %v643
          %v999 = vpop.f32.mrb[0].mxu0
          %v1000 = vadd.f32 %v895, %v999
          %v1001 = vpop.f32.mrb[0].mxu0
          %1002 = vmatprep.mubr.f32.mxu0 %v652
          %1003 = vmatmul.mubr.f32.gmra.mrb[0].mxu0 %v651
          %v1004 = vpop.f32.mrb[0].mxu0
          %v1005 = vadd.f32 %v900, %v1004
          %v1006 = vpop.f32.mrb[0].mxu0
          %1007 = vmatprep.mubr.f32.mxu0 %v660
          %1008 = vmatmul.mubr.f32.gmra.mrb[0].mxu0 %v659
          %v1009 = vpop.f32.mrb[0].mxu0
          %v1010 = vadd.f32 %v905, %v1009
          %v1011 = vpop.f32.mrb[0].mxu0
          %1012 = vmatprep.mubr.f32.mxu0 %v668
          %1013 = vmatmul.mubr.f32.gmra.mrb[0].mxu0 %v667
          %v1014 = vpop.f32.mrb[0].mxu0
          %v1015 = vadd.f32 %v910, %v1014
          %v1016 = vpop.f32.mrb[0].mxu0
          %1017 = vdwg.mxu0
          %1018 = vmatprep.subr.mxu0 0.0
          %1019 = vmatpush1.msra.mxu0 %v737
          %1020 = vmatprep.subr.mxu0 0.0
          %1021 = vmatpush1.msra.mxu0 %v738
          %1022 = vmatprep.subr.mxu0 0.0
          %1023 = vmatpush1.msra.mxu0 %v739
          %1024 = vmatprep.subr.mxu0 0.0
          %1025 = vmatpush1.msra.mxu0 %v740
          %1026 = vmatprep.subr.mxu0 0.0
          %1027 = vmatpush1.msra.mxu0 %v741
          %1028 = vmatprep.subr.mxu0 0.0
          %1029 = vmatpush1.msra.mxu0 %v742
          %1030 = vmatprep.subr.mxu0 0.0
          %1031 = vmatpush1.msra.mxu0 %v743
          %1032 = vmatprep.subr.mxu0 0.0
          %1033 = vmatpush1.msra.mxu0 %v744
          %1034 = vmatprep.subr.mxu0 0.0
          %1035 = vmatpush1.msra.mxu0 %v745
          %1036 = vmatprep.subr.mxu0 0.0
          %1037 = vmatpush1.msra.mxu0 %v746
          %1038 = vmatprep.subr.mxu0 0.0
          %1039 = vmatpush1.msra.mxu0 %v747
          %1040 = vmatprep.subr.mxu0 0.0
          %1041 = vmatpush1.msra.mxu0 %v748
          %1042 = vmatprep.subr.mxu0 0.0
          %1043 = vmatpush1.msra.mxu0 %v749
          %1044 = vmatprep.subr.mxu0 0.0
          %1045 = vmatpush1.msra.mxu0 %v750
          %1046 = vmatprep.subr.mxu0 0.0
          %1047 = vmatpush1.msra.mxu0 %v751
          %1048 = vmatprep.subr.mxu0 0.0
          %1049 = vmatpush1.msra.mxu0 %v752
          %1050 = vmatprep.subr.mxu0 0.0
          %1051 = vmatpush1.msra.mxu0 %v753
          %1052 = vmatprep.subr.mxu0 0.0
          %1053 = vmatpush1.msra.mxu0 %v754
          %1054 = vmatprep.subr.mxu0 0.0
          %1055 = vmatpush1.msra.mxu0 %v755
          %1056 = vmatprep.subr.mxu0 0.0
          %1057 = vmatpush1.msra.mxu0 %v756
          %1058 = vmatprep.subr.mxu0 0.0
          %1059 = vmatpush1.msra.mxu0 %v757
          %1060 = vmatprep.subr.mxu0 0.0
          %1061 = vmatpush1.msra.mxu0 %v758
          %1062 = vmatprep.subr.mxu0 0.0
          %1063 = vmatpush1.msra.mxu0 %v759
          %1064 = vmatprep.subr.mxu0 0.0
          %1065 = vmatpush1.msra.mxu0 %v760
          %1066 = vmatprep.subr.mxu0 0.0
          %1067 = vmatpush1.msra.mxu0 %v761
          %1068 = vmatprep.subr.mxu0 0.0
          %1069 = vmatpush1.msra.mxu0 %v762
          %1070 = vmatprep.subr.mxu0 0.0
          %1071 = vmatpush1.msra.mxu0 %v763
          %1072 = vmatprep.subr.mxu0 0.0
          %1073 = vmatpush1.msra.mxu0 %v764
          %1074 = vmatprep.subr.mxu0 0.0
          %1075 = vmatpush1.msra.mxu0 %v765
          %1076 = vmatprep.subr.mxu0 0.0
          %1077 = vmatpush1.msra.mxu0 %v766
          %1078 = vmatprep.subr.mxu0 0.0
          %1079 = vmatpush1.msra.mxu0 %v767
          %1080 = vmatprep.subr.mxu0 0.0
          %1081 = vmatpush1.msra.mxu0 %v768
          %1082 = vmatprep.mubr.f32.mxu0 %v614
          %1083 = vmatmul.mubr.f32.gmra.mrb[0].mxu0 %v613
          %v1084 = vpop.f32.mrb[0].mxu0
          %v1085 = vadd.f32 %v980, %v1084
          %v1086 = vpop.f32.mrb[0].mxu0
          %1087 = vmatprep.mubr.f32.mxu0 %v622
          %1088 = vmatmul.mubr.f32.gmra.mrb[0].mxu0 %v621
          %v1089 = vpop.f32.mrb[0].mxu0
          %v1090 = vadd.f32 %v985, %v1089
          %v1091 = vpop.f32.mrb[0].mxu0
          %1092 = vmatprep.mubr.f32.mxu0 %v630
          %1093 = vmatmul.mubr.f32.gmra.mrb[0].mxu0 %v629
          %v1094 = vpop.f32.mrb[0].mxu0
          %v1095 = vadd.f32 %v990, %v1094
          %v1096 = vpop.f32.mrb[0].mxu0
          %1097 = vmatprep.mubr.f32.mxu0 %v638
          %1098 = vmatmul.mubr.f32.gmra.mrb[0].mxu0 %v637
          %v1099 = vpop.f32.mrb[0].mxu0
          %v1100 = vadd.f32 %v995, %v1099
          %v1101 = vpop.f32.mrb[0].mxu0
          %1102 = vmatprep.mubr.f32.mxu0 %v646
          %1103 = vmatmul.mubr.f32.gmra.mrb[0].mxu0 %v645
          %v1104 = vpop.f32.mrb[0].mxu0
          %v1105 = vadd.f32 %v1000, %v1104
          %v1106 = vpop.f32.mrb[0].mxu0
          %1107 = vmatprep.mubr.f32.mxu0 %v654
          %1108 = vmatmul.mubr.f32.gmra.mrb[0].mxu0 %v653
          %v1109 = vpop.f32.mrb[0].mxu0
          %v1110 = vadd.f32 %v1005, %v1109
          %v1111 = vpop.f32.mrb[0].mxu0
          %1112 = vmatprep.mubr.f32.mxu0 %v662
          %1113 = vmatmul.mubr.f32.gmra.mrb[0].mxu0 %v661
          %v1114 = vpop.f32.mrb[0].mxu0
          %v1115 = vadd.f32 %v1010, %v1114
          %v1116 = vpop.f32.mrb[0].mxu0
          %1117 = vmatprep.mubr.f32.mxu0 %v670
          %1118 = vmatmul.mubr.f32.gmra.mrb[0].mxu0 %v669
          %v1119 = vpop.f32.mrb[0].mxu0
          %v1120 = vadd.f32 %v1015, %v1119
          %v1121 = vpop.f32.mrb[0].mxu0
          %1122 = vdwg.mxu0
          %1123 = vmatprep.subr.mxu0 0.0
          %1124 = vmatpush1.msra.mxu0 %v769
          %1125 = vmatprep.subr.mxu0 0.0
          %1126 = vmatpush1.msra.mxu0 %v770
          %1127 = vmatprep.subr.mxu0 0.0
          %1128 = vmatpush1.msra.mxu0 %v771
          %1129 = vmatprep.subr.mxu0 0.0
          %1130 = vmatpush1.msra.mxu0 %v772
          %1131 = vmatprep.subr.mxu0 0.0
          %1132 = vmatpush1.msra.mxu0 %v773
          %1133 = vmatprep.subr.mxu0 0.0
          %1134 = vmatpush1.msra.mxu0 %v774
          %1135 = vmatprep.subr.mxu0 0.0
          %1136 = vmatpush1.msra.mxu0 %v775
          %1137 = vmatprep.subr.mxu0 0.0
          %1138 = vmatpush1.msra.mxu0 %v776
          %1139 = vmatprep.subr.mxu0 0.0
          %1140 = vmatpush1.msra.mxu0 %v777
          %1141 = vmatprep.subr.mxu0 0.0
          %1142 = vmatpush1.msra.mxu0 %v778
          %1143 = vmatprep.subr.mxu0 0.0
          %1144 = vmatpush1.msra.mxu0 %v779
          %1145 = vmatprep.subr.mxu0 0.0
          %1146 = vmatpush1.msra.mxu0 %v780
          %1147 = vmatprep.subr.mxu0 0.0
          %1148 = vmatpush1.msra.mxu0 %v781
          %1149 = vmatprep.subr.mxu0 0.0
          %1150 = vmatpush1.msra.mxu0 %v782
          %1151 = vmatprep.subr.mxu0 0.0
          %1152 = vmatpush1.msra.mxu0 %v783
          %1153 = vmatprep.subr.mxu0 0.0
          %1154 = vmatpush1.msra.mxu0 %v784
          %1155 = vmatprep.subr.mxu0 0.0
          %1156 = vmatpush1.msra.mxu0 %v785
          %1157 = vmatprep.subr.mxu0 0.0
          %1158 = vmatpush1.msra.mxu0 %v786
          %1159 = vmatprep.subr.mxu0 0.0
          %1160 = vmatpush1.msra.mxu0 %v787
          %1161 = vmatprep.subr.mxu0 0.0
          %1162 = vmatpush1.msra.mxu0 %v788
          %1163 = vmatprep.subr.mxu0 0.0
          %1164 = vmatpush1.msra.mxu0 %v789
          %1165 = vmatprep.subr.mxu0 0.0
          %1166 = vmatpush1.msra.mxu0 %v790
          %1167 = vmatprep.subr.mxu0 0.0
          %1168 = vmatpush1.msra.mxu0 %v791
          %1169 = vmatprep.subr.mxu0 0.0
          %1170 = vmatpush1.msra.mxu0 %v792
          %1171 = vmatprep.subr.mxu0 0.0
          %1172 = vmatpush1.msra.mxu0 %v793
          %1173 = vmatprep.subr.mxu0 0.0
          %1174 = vmatpush1.msra.mxu0 %v794
          %1175 = vmatprep.subr.mxu0 0.0
          %1176 = vmatpush1.msra.mxu0 %v795
          %1177 = vmatprep.subr.mxu0 0.0
          %1178 = vmatpush1.msra.mxu0 %v796
          %1179 = vmatprep.subr.mxu0 0.0
          %1180 = vmatpush1.msra.mxu0 %v797
          %1181 = vmatprep.subr.mxu0 0.0
          %1182 = vmatpush1.msra.mxu0 %v798
          %1183 = vmatprep.subr.mxu0 0.0
          %1184 = vmatpush1.msra.mxu0 %v799
          %1185 = vmatprep.subr.mxu0 0.0
          %1186 = vmatpush1.msra.mxu0 %v800
          %1187 = vmatprep.mubr.f32.mxu0 %v616
          %1188 = vmatmul.mubr.f32.gmra.mrb[0].mxu0 %v615
          %v1189 = vpop.f32.mrb[0].mxu0
          %v1190 = vadd.f32 %v1085, %v1189
          %v1191 = vpop.f32.mrb[0].mxu0
          %1192 = vmatprep.mubr.f32.mxu0 %v624
          %1193 = vmatmul.mubr.f32.gmra.mrb[0].mxu0 %v623
          %v1194 = vpop.f32.mrb[0].mxu0
          %v1195 = vadd.f32 %v1090, %v1194
          %v1196 = vpop.f32.mrb[0].mxu0
          %1197 = vmatprep.mubr.f32.mxu0 %v632
          %1198 = vmatmul.mubr.f32.gmra.mrb[0].mxu0 %v631
          %v1199 = vpop.f32.mrb[0].mxu0
          %v1200 = vadd.f32 %v1095, %v1199
          %v1201 = vpop.f32.mrb[0].mxu0
          %1202 = vmatprep.mubr.f32.mxu0 %v640
          %1203 = vmatmul.mubr.f32.gmra.mrb[0].mxu0 %v639
          %v1204 = vpop.f32.mrb[0].mxu0
          %v1205 = vadd.f32 %v1100, %v1204
          %v1206 = vpop.f32.mrb[0].mxu0
          %1207 = vmatprep.mubr.f32.mxu0 %v648
          %1208 = vmatmul.mubr.f32.gmra.mrb[0].mxu0 %v647
          %v1209 = vpop.f32.mrb[0].mxu0
          %v1210 = vadd.f32 %v1105, %v1209
          %v1211 = vpop.f32.mrb[0].mxu0
          %1212 = vmatprep.mubr.f32.mxu0 %v656
          %1213 = vmatmul.mubr.f32.gmra.mrb[0].mxu0 %v655
          %v1214 = vpop.f32.mrb[0].mxu0
          %v1215 = vadd.f32 %v1110, %v1214
          %v1216 = vpop.f32.mrb[0].mxu0
          %1217 = vmatprep.mubr.f32.mxu0 %v664
          %1218 = vmatmul.mubr.f32.gmra.mrb[0].mxu0 %v663
          %v1219 = vpop.f32.mrb[0].mxu0
          %v1220 = vadd.f32 %v1115, %v1219
          %v1221 = vpop.f32.mrb[0].mxu0
          %1222 = vmatprep.mubr.f32.mxu0 %v672
          %1223 = vmatmul.mubr.f32.gmra.mrb[0].mxu0 %v671
          %v1224 = vpop.f32.mrb[0].mxu0
          %v1225 = vadd.f32 %v1120, %v1224
          %v1226 = vpop.f32.mrb[0].mxu0
          %1227 = vdwg.mxu0
          %1228 = vst [vmem:[#allocation2] sm:$0xff] %v1190
          %1229 = vst [vmem:[#allocation2 + $0x8] sm:$0xff] %v1195
          %1230 = vst [vmem:[#allocation2 + $0x10] sm:$0xff] %v1200
          %1231 = vst [vmem:[#allocation2 + $0x18] sm:$0xff] %v1205
          %1232 = vst [vmem:[#allocation2 + $0x20] sm:$0xff] %v1210
          %1233 = vst [vmem:[#allocation2 + $0x28] sm:$0xff] %v1215
          %1234 = vst [vmem:[#allocation2 + $0x30] sm:$0xff] %v1220
          %1235 = vst [vmem:[#allocation2 + $0x38] sm:$0xff] %v1225
        $region56: #{tpu_custom_call.1} parent=39 // pred_fallthru
          _
        %v1236 = vld [vmem:[#allocation2] sm:$0xff]
        %v1237 = vld [vmem:[#allocation2 + $0x8] sm:$0xff]
        %v1238 = vld [vmem:[#allocation2 + $0x10] sm:$0xff]
        %v1239 = vld [vmem:[#allocation2 + $0x18] sm:$0xff]
        %v1240 = vld [vmem:[#allocation2 + $0x20] sm:$0xff]
        %v1241 = vld [vmem:[#allocation2 + $0x28] sm:$0xff]
        %v1242 = vld [vmem:[#allocation2 + $0x30] sm:$0xff]
        %v1243 = vld [vmem:[#allocation2 + $0x38] sm:$0xff]
        %v1244 = vld [vmem:[%s288] sm:$0xff]
        %v1245 = vld [vmem:[%s288 + $0x8] sm:$0xff]
        %v1246 = vld [vmem:[%s288 + $0x10] sm:$0xff]
        %v1247 = vld [vmem:[%s288 + $0x18] sm:$0xff]
        %v1248 = vld [vmem:[%s288 + $0x20] sm:$0xff]
        %v1249 = vld [vmem:[%s288 + $0x28] sm:$0xff]
        %v1250 = vld [vmem:[%s288 + $0x30] sm:$0xff]
        %v1251 = vld [vmem:[%s288 + $0x38] sm:$0xff]
        %v1252 = vld [vmem:[%s288 + $0x40] sm:$0xff]
        %v1253 = vld [vmem:[%s288 + $0x48] sm:$0xff]
        %v1254 = vld [vmem:[%s288 + $0x50] sm:$0xff]
        %v1255 = vld [vmem:[%s288 + $0x58] sm:$0xff]
        %v1256 = vld [vmem:[%s288 + $0x60] sm:$0xff]
        %v1257 = vld [vmem:[%s288 + $0x68] sm:$0xff]
        %v1258 = vld [vmem:[%s288 + $0x70] sm:$0xff]
        %v1259 = vld [vmem:[%s288 + $0x78] sm:$0xff]
        %v1260 = vld [vmem:[%s288 + $0x80] sm:$0xff]
        %v1261 = vld [vmem:[%s288 + $0x88] sm:$0xff]
        %v1262 = vld [vmem:[%s288 + $0x90] sm:$0xff]
        %v1263 = vld [vmem:[%s288 + $0x98] sm:$0xff]
        %v1264 = vld [vmem:[%s288 + $0xa0] sm:$0xff]
        %v1265 = vld [vmem:[%s288 + $0xa8] sm:$0xff]
        %v1266 = vld [vmem:[%s288 + $0xb0] sm:$0xff]
        %v1267 = vld [vmem:[%s288 + $0xb8] sm:$0xff]
        %v1268 = vld [vmem:[%s288 + $0xc0] sm:$0xff]
        %v1269 = vld [vmem:[%s288 + $0xc8] sm:$0xff]
        %v1270 = vld [vmem:[%s288 + $0xd0] sm:$0xff]
        %v1271 = vld [vmem:[%s288 + $0xd8] sm:$0xff]
        %v1272 = vld [vmem:[%s288 + $0xe0] sm:$0xff]
        %v1273 = vld [vmem:[%s288 + $0xe8] sm:$0xff]
        %v1274 = vld [vmem:[%s288 + $0xf0] sm:$0xff]
        %v1275 = vld [vmem:[%s288 + $0xf8] sm:$0xff]
        %v1276 = vld [vmem:[%s329] sm:$0x3]
        %v1278 = vlaneseq
        %v1279 = vshrl.u32 %v1278, 7
        %v1280 = vsub.s32 0, %v1279
        %v1281 = vrot.slane %v1276, %v1280
        %v1282 = vlaneseq
        %v1283 = vshrl.u32 %v1282, 7
        %v1284 = vsub.s32 1, %v1283
        %v1285 = vrot.slane %v1276, %v1284
        %1288 = vmatprep.subr.mxu0 %v1245
        %1289 = vmatpush1.msra.mxu0 %v1244
        %1290 = vmatprep.subr.mxu0 %v1247
        %1291 = vmatpush1.msra.mxu0 %v1246
        %1292 = vmatprep.subr.mxu0 %v1249
        %1293 = vmatpush1.msra.mxu0 %v1248
        %1294 = vmatprep.subr.mxu0 %v1251
        %1295 = vmatpush1.msra.mxu0 %v1250
        %1296 = vmatprep.subr.mxu0 %v1253
        %1297 = vmatpush1.msra.mxu0 %v1252
        %1298 = vmatprep.subr.mxu0 %v1255
        %1299 = vmatpush1.msra.mxu0 %v1254
        %1300 = vmatprep.subr.mxu0 %v1257
        %1301 = vmatpush1.msra.mxu0 %v1256
        %1302 = vmatprep.subr.mxu0 %v1259
        %1303 = vmatpush1.msra.mxu0 %v1258
        %1304 = vmatprep.subr.mxu0 %v1261
        %1305 = vmatpush1.msra.mxu0 %v1260
        %1306 = vmatprep.subr.mxu0 %v1263
        %1307 = vmatpush1.msra.mxu0 %v1262
        %1308 = vmatprep.subr.mxu0 %v1265
        %1309 = vmatpush1.msra.mxu0 %v1264
        %1310 = vmatprep.subr.mxu0 %v1267
        %1311 = vmatpush1.msra.mxu0 %v1266
        %1312 = vmatprep.subr.mxu0 %v1269
        %1313 = vmatpush1.msra.mxu0 %v1268
        %1314 = vmatprep.subr.mxu0 %v1271
        %1315 = vmatpush1.msra.mxu0 %v1270
        %1316 = vmatprep.subr.mxu0 %v1273
        %1317 = vmatpush1.msra.mxu0 %v1272
        %1318 = vmatprep.subr.mxu0 %v1275
        %1319 = vmatpush1.msra.mxu0 %v1274
        %1320 = vmatprep.subr.mxu0 0.0
        %1321 = vmatpush1.msra.mxu0 0.0
        %1322 = vmatprep.subr.mxu0 0.0
        %1323 = vmatpush1.msra.mxu0 0.0
        %1324 = vmatprep.subr.mxu0 0.0
        %1325 = vmatpush1.msra.mxu0 0.0
        %1326 = vmatprep.subr.mxu0 0.0
        %1327 = vmatpush1.msra.mxu0 0.0
        %1328 = vmatprep.subr.mxu0 0.0
        %1329 = vmatpush1.msra.mxu0 0.0
        %1330 = vmatprep.subr.mxu0 0.0
        %1331 = vmatpush1.msra.mxu0 0.0
        %1332 = vmatprep.subr.mxu0 0.0
        %1333 = vmatpush1.msra.mxu0 0.0
        %1334 = vmatprep.subr.mxu0 0.0
        %1335 = vmatpush1.msra.mxu0 0.0
        %1336 = vmatprep.subr.mxu0 0.0
        %1337 = vmatpush1.msra.mxu0 0.0
        %1338 = vmatprep.subr.mxu0 0.0
        %1339 = vmatpush1.msra.mxu0 0.0
        %1340 = vmatprep.subr.mxu0 0.0
        %1341 = vmatpush1.msra.mxu0 0.0
        %1342 = vmatprep.subr.mxu0 0.0
        %1343 = vmatpush1.msra.mxu0 0.0
        %1344 = vmatprep.subr.mxu0 0.0
        %1345 = vmatpush1.msra.mxu0 0.0
        %1346 = vmatprep.subr.mxu0 0.0
        %1347 = vmatpush1.msra.mxu0 0.0
        %1348 = vmatprep.subr.mxu0 0.0
        %1349 = vmatpush1.msra.mxu0 0.0
        %1350 = vmatprep.subr.mxu0 0.0
        %1351 = vmatpush1.msra.mxu0 0.0
        %1352 = vmatprep.mubr.f32.mxu0 0.0
        %1353 = vmatmul.mubr.f32.gmra.mrb[0].mxu0 %v1236
        %v1354 = vpop.f32.mrb[0].mxu0
        %v1355 = vadd.f32 %v1281, %v1354
        %v1356 = vpop.f32.mrb[0].mxu0
        %v1357 = vadd.f32 %v1285, %v1356
        %1358 = vmatprep.mubr.f32.mxu0 0.0
        %1359 = vmatmul.mubr.f32.gmra.mrb[0].mxu0 %v1237
        %v1360 = vpop.f32.mrb[0].mxu0
        %v1361 = vadd.f32 %v1281, %v1360
        %v1362 = vpop.f32.mrb[0].mxu0
        %v1363 = vadd.f32 %v1285, %v1362
        %1364 = vmatprep.mubr.f32.mxu0 0.0
        %1365 = vmatmul.mubr.f32.gmra.mrb[0].mxu0 %v1238
        %v1366 = vpop.f32.mrb[0].mxu0
        %v1367 = vadd.f32 %v1281, %v1366
        %v1368 = vpop.f32.mrb[0].mxu0
        %v1369 = vadd.f32 %v1285, %v1368
        %1370 = vmatprep.mubr.f32.mxu0 0.0
        %1371 = vmatmul.mubr.f32.gmra.mrb[0].mxu0 %v1239
        %v1372 = vpop.f32.mrb[0].mxu0
        %v1373 = vadd.f32 %v1281, %v1372
        %v1374 = vpop.f32.mrb[0].mxu0
        %v1375 = vadd.f32 %v1285, %v1374
        %1376 = vmatprep.mubr.f32.mxu0 0.0
        %1377 = vmatmul.mubr.f32.gmra.mrb[0].mxu0 %v1240
        %v1378 = vpop.f32.mrb[0].mxu0
        %v1379 = vadd.f32 %v1281, %v1378
        %v1380 = vpop.f32.mrb[0].mxu0
        %v1381 = vadd.f32 %v1285, %v1380
        %1382 = vmatprep.mubr.f32.mxu0 0.0
        %1383 = vmatmul.mubr.f32.gmra.mrb[0].mxu0 %v1241
        %v1384 = vpop.f32.mrb[0].mxu0
        %v1385 = vadd.f32 %v1281, %v1384
        %v1386 = vpop.f32.mrb[0].mxu0
        %v1387 = vadd.f32 %v1285, %v1386
        %1388 = vmatprep.mubr.f32.mxu0 0.0
        %1389 = vmatmul.mubr.f32.gmra.mrb[0].mxu0 %v1242
        %v1390 = vpop.f32.mrb[0].mxu0
        %v1391 = vadd.f32 %v1281, %v1390
        %v1392 = vpop.f32.mrb[0].mxu0
        %v1393 = vadd.f32 %v1285, %v1392
        %1394 = vmatprep.mubr.f32.mxu0 0.0
        %1395 = vmatmul.mubr.f32.gmra.mrb[0].mxu0 %v1243
        %v1396 = vpop.f32.mrb[0].mxu0
        %v1397 = vadd.f32 %v1281, %v1396
        %v1398 = vpop.f32.mrb[0].mxu0
        %v1399 = vadd.f32 %v1285, %v1398
        %1400 = vdwg.mxu0
        %1401 = vst [vmem:[%s323] sm:$0xff] %v1355
        %1402 = vst [vmem:[%s323 + $0x8] sm:$0xff] %v1357
        %1403 = vst [vmem:[%s323 + $0x10] sm:$0xff] %v1361
        %1404 = vst [vmem:[%s323 + $0x18] sm:$0xff] %v1363
        %1405 = vst [vmem:[%s323 + $0x20] sm:$0xff] %v1367
        %1406 = vst [vmem:[%s323 + $0x28] sm:$0xff] %v1369
        %1407 = vst [vmem:[%s323 + $0x30] sm:$0xff] %v1373
        %1408 = vst [vmem:[%s323 + $0x38] sm:$0xff] %v1375
        %1409 = vst [vmem:[%s323 + $0x40] sm:$0xff] %v1379
        %1410 = vst [vmem:[%s323 + $0x48] sm:$0xff] %v1381
        %1411 = vst [vmem:[%s323 + $0x50] sm:$0xff] %v1385
        %1412 = vst [vmem:[%s323 + $0x58] sm:$0xff] %v1387
        %1413 = vst [vmem:[%s323 + $0x60] sm:$0xff] %v1391
        %1414 = vst [vmem:[%s323 + $0x68] sm:$0xff] %v1393
        %1415 = vst [vmem:[%s323 + $0x70] sm:$0xff] %v1397
        %1416 = vst [vmem:[%s323 + $0x78] sm:$0xff] %v1399
        %s1417 = sand.u32 %s165, 1
        %s1418 = scalar_lea.sflag [#allocation5], %s1417
        %s1419 = sand.u32 %s165, 1
        %s1420 = smul.addr %s1419, 128
        %s1421 = scalar_lea.vmem [#allocation9], %s1420
        // Predicated region
        $region57: #{tpu_custom_call.1} parent=39 // pred_check
          %p1422 = pneg %p175
        $region58: #{tpu_custom_call.1} parent=39 // pred_check_branch
          %1424 = sbr.rel (%p1422) target = $region60
        $region59: #{tpu_custom_call.1} parent=39 // pred_region
          %s1425 = smul.u32 8, %s27
          %s1426 = smul.u32 2, %s28
          %s1428 = ssub.s32 2048, 2048
          %1429 = vsyncadd %s1418, %s1428
          %s1430 = smul.addr %s1425, 8
          %s1431 = sadd.s32 %s1426, %s1430
          %s1432 = smul.addr %s1431, 128
          %s1433 = scalar_lea.hbm %s5, %s1432
          %s1434 = sshll.u32 %s1421, 4
          %s1435 = int_to_ptr.vmem [resolvable:$true] %s1434
          %1440 = dma.vmem_to_hbm [thread:$0]  %s1435, 2048, %s1433, %s1418, 256, 1024, 16
        $region60: #{tpu_custom_call.1} parent=39 // pred_fallthru
          _
      $region40: #{tpu_custom_call.1} parent=5 // pred_fallthru
        _
      %p1441 = scmp.le.s32.totalorder 2, %s18
      // Predicated region
      $region61: #{tpu_custom_call.1} parent=5 // pred_check
        %p1442 = pneg %p1441
      $region62: #{tpu_custom_call.1} parent=5 // pred_check_branch
        %1444 = sbr.rel (%p1442) target = $region64
      $region63: #{tpu_custom_call.1} parent=5 // pred_region
        %s1445 = ssub.s32 %s18, 2
        // Predicated region
        $region65: #{tpu_custom_call.1} parent=63 // pred_check
          %p1446 = pneg %p181
        $region66: #{tpu_custom_call.1} parent=63 // pred_check_branch
          %1448 = sbr.rel (%p1446) target = $region68
        $region67: #{tpu_custom_call.1} parent=63 // pred_region
          %s1449 = sand.u32 %s166, 1
          %s1450 = scalar_lea.sflag [#allocation5], %s1449
          %s1451 = sand.u32 %s166, 1
          %s1452 = smul.addr %s1451, 128
          %s1453 = scalar_lea.vmem [#allocation9], %s1452
          %1454 = dma.done %s1450, 2048
        $region68: #{tpu_custom_call.1} parent=63 // pred_fallthru
          _
      $region64: #{tpu_custom_call.1} parent=5 // pred_fallthru
        _
    $region6: #{tpu_custom_call.1} parent=1 // loop_footer
      %s22 = sadd.s32 1, %s18
    $region7: #{tpu_custom_call.1} parent=1 // loop_footer_branch
      %17 = sbr.rel target = $region3
    $region8: #{tpu_custom_call.1} parent=1 // loop_exit
      _
    %1455 = vsyncpa [#allocation4], 1
    %s1456 = scalar_lea.sflag [#allocation4], 1
    %1457 = vsyncpa %s1456, 1
    %1458 = vsyncpa [#allocation7], 1
    %1459 = vsyncpa [#allocation5], 1
    %s1460 = scalar_lea.sflag [#allocation5], 1
    %1461 = vsyncpa %s1460, 1

</llo_original>
